<compile_context>
chip_gen: v5e
topology: v5e:2x2
jax: 0.10.0
libtpu: 0.0.40
codegen_flags: <defaults>
</compile_context>

<pallas_src>
import functools
import math

import jax
import jax.numpy as jnp
from jax.experimental import pallas as pl
from jax.experimental.pallas import tpu as pltpu

_LANE = 128
_BF16_ROWS = 16            # bf16 packs 16 rows per sublane group
_DEFAULT_TILE_B = 2048     # rows per grid step (review: 2048-4096), VMEM-clamped below


def _round_up(x: int, m: int) -> int:
    return (x + m - 1) // m * m


def _cdiv(a: int, b: int) -> int:
    return -(-a // b)


# --------------------------------------------------------------------------------------
# Kernel: 8 fused linears (+ReLU, final Sigmoid) on one batch tile.
# --------------------------------------------------------------------------------------
def _mlp_ae_kernel(x_ref,
                   w1, b1, w2, b2, w3, b3, w4, b4,      # encoder
                   w5, b5, w6, b6, w7, b7, w8, b8,      # decoder
                   o_ref):

    def linear(h_bf16, w_ref, b_ref):
        # bf16 MXU operands, f32 accumulation; bias add in f32.
        return jnp.dot(h_bf16, w_ref[...], preferred_element_type=jnp.float32) + b_ref[...]

    def relu_bf16(y_f32):
        # ReLU in f32 (VPU), cast back to bf16 only as the next MXU operand.
        return jnp.maximum(y_f32, 0.0).astype(jnp.bfloat16)

    # Input may arrive as f32 (aligned fast path) or bf16 (padded path): cast in-kernel.
    h = x_ref[...].astype(jnp.bfloat16)                  # (TILE_B, Din_pad)

    # Encoder: Din -> 128 -> 64 -> 32 -> 16   (all lane-padded to 128)
    h = relu_bf16(linear(h, w1, b1))
    h = relu_bf16(linear(h, w2, b2))
    h = relu_bf16(linear(h, w3, b3))
    h = linear(h, w4, b4).astype(jnp.bfloat16)           # bottleneck, no activation

    # Decoder: 16 -> 32 -> 64 -> 128 -> Din, Sigmoid at the end
    h = relu_bf16(linear(h, w5, b5))
    h = relu_bf16(linear(h, w6, b6))
    h = relu_bf16(linear(h, w7, b7))
    z = linear(h, w8, b8)                                # f32 (TILE_B, Din_pad)

    # sigmoid(z) = 1 / (1 + exp(-z)): exp + reciprocal land on the EUP slot (far from saturated,
    # so approx=False is free and tighter).
    o_ref[...] = pl.reciprocal(1.0 + jnp.exp(-z), approx=False).astype(o_ref.dtype)


# --------------------------------------------------------------------------------------
# Parameter helpers
# --------------------------------------------------------------------------------------
def init_params(key, input_dim: int, hidden_dim: int, dtype=jnp.float32):
    """Deterministic init matching MLPAutoEncoder's layer shapes (weights stored transposed)."""
    del hidden_dim  # unused by the PyTorch module's forward; kept for API parity
    dims = [input_dim, 128, 64, 32, 16, 32, 64, 128, input_dim]
    params = []
    for i in range(8):
        key, kw, kb = jax.random.split(key, 3)
        bound = 1.0 / math.sqrt(dims[i])
        w = jax.random.uniform(kw, (dims[i], dims[i + 1]), dtype, -bound, bound)
        b = jax.random.uniform(kb, (1, dims[i + 1]), dtype, -bound, bound)
        params.append((w, b))
    return params


def prepare_params(params):
    """Zero-pad every feature dim up to a multiple of 128 (lane-dense) and cast weights to bf16
    (MXU operand dtype). Biases stay f32 (post-matmul math runs in f32). Padded bias columns
    are zero so ReLU keeps padded lanes at exactly 0."""
    prepped = []
    for w, b in params:
        in_p = _round_up(w.shape[0], _LANE)
        out_p = _round_up(w.shape[1], _LANE)
        w_p = jnp.zeros((in_p, out_p), jnp.bfloat16)
        w_p = w_p.at[: w.shape[0], : w.shape[1]].set(w.astype(jnp.bfloat16))
        b_p = jnp.zeros((1, out_p), jnp.float32)
        b_p = b_p.at[:, : b.shape[1]].set(b.astype(jnp.float32))
        prepped.append((w_p, b_p))
    return prepped


# --------------------------------------------------------------------------------------
# Tiling / VMEM sizing
# --------------------------------------------------------------------------------------
@functools.lru_cache(maxsize=1)
def _vmem_budget_bytes() -> int:
    """Per-core VMEM we are willing to request: physical capacity minus headroom for Mosaic
    internal scratch. ~52 MiB on v7x (64 MiB physical), capped at 100 MiB on v5e/v6e (128 MiB)."""
    cap = 64 << 20  # conservative default (v7x physical per-TC VMEM)
    try:
        info = pltpu.get_tpu_info()
        cap = int(getattr(info, "vmem_capacity_bytes", cap))
    except Exception:
        pass
    return int(max(min(cap - (12 << 20), 100 << 20), 16 << 20))


def _choose_tile_b(batch: int, requested: int, row_bytes: int,
                   vmem_budget: int, fixed_bytes: int) -> int:
    # Round to bf16 sublane packing (16 rows), never larger than the (rounded) batch.
    tile = min(requested, _round_up(batch, _BF16_ROWS))
    tile = max(_BF16_ROWS, _round_up(tile, _BF16_ROWS))

    # VMEM-aware cap: per-row footprint includes the din_pad-wide f32 intermediates.
    avail = vmem_budget - fixed_bytes - (4 << 20)
    if avail > 0:
        cap = max(_BF16_ROWS, (avail // row_bytes) // _BF16_ROWS * _BF16_ROWS)
        tile = min(tile, cap)

    # Keep >= 2 grid steps when the batch is big enough to split (v7x: 2 TensorCores share the
    # "parallel" grid axis; a 1-step grid leaves one TC idle).
    while tile > 512 and _cdiv(batch, tile) < 2:
        tile = max(_BF16_ROWS, _round_up(tile // 2, _BF16_ROWS))
    return tile


# --------------------------------------------------------------------------------------
# Forward pass
# --------------------------------------------------------------------------------------
@functools.partial(jax.jit, static_argnames=("tile_b", "out_dtype", "single_buffer_weights"))
def _mlp_ae_forward(x, prepped_params, *, tile_b, out_dtype, single_buffer_weights):
    batch, input_dim = x.shape
    din_pad = _round_up(input_dim, _LANE)
    out_dtype = jnp.dtype(out_dtype)
    out_isize = out_dtype.itemsize

    needs_feature_pad = din_pad != input_dim
    in_isize = 2 if needs_feature_pad else jnp.dtype(x.dtype).itemsize

    # VMEM accounting: f32 pre-sigmoid intermediate and widest bf16 activation are din_pad wide.
    param_bytes = sum(w.size * w.dtype.itemsize + b.size * b.dtype.itemsize
                      for w, b in prepped_params)
    weight_bufs = 1 if single_buffer_weights else 2
    row_bytes = (din_pad * (2 * in_isize        # input tile, double-buffered
                            + 2 * out_isize     # output tile, double-buffered
                            + 4                 # f32 pre-sigmoid intermediate
                            + 2)                # bf16 copy of the widest activation
                 + 6 * _LANE * 4)               # hidden-layer activations (<=128 lanes, f32)
    budget = _vmem_budget_bytes()

    tile_b = _choose_tile_b(batch, tile_b, row_bytes, budget, param_bytes * weight_bufs)
    batch_pad = _round_up(batch, tile_b)
    needs_pad = needs_feature_pad or (batch_pad != batch)

    if needs_pad:
        # Single fused pad+cast pass (bf16 halves the kernel's input DMA bytes).
        x_in = jnp.zeros((batch_pad, din_pad), jnp.bfloat16)
        x_in = x_in.at[:batch, :input_dim].set(x.astype(jnp.bfloat16))
    else:
        # Aligned fast path: no wrapper-side HBM round trip; kernel casts to bf16 in VMEM.
        x_in = x

    flat = [x_in]
    for w, b in prepped_params:
        flat.extend([w, b])

    const_map = lambda i: (0, 0)   # weights/biases: grid-invariant, DMA'd once, VMEM-resident
    if single_buffer_weights:
        def const_spec(shape):
            return pl.BlockSpec(shape, const_map, pipeline_mode=pl.Buffered(1))
    else:
        def const_spec(shape):
            return pl.BlockSpec(shape, const_map)

    in_specs = [pl.BlockSpec((tile_b, din_pad), lambda i: (i, 0))]
    for w, b in prepped_params:
        in_specs.append(const_spec(w.shape))
        in_specs.append(const_spec(b.shape))
    out_spec = pl.BlockSpec((tile_b, din_pad), lambda i: (i, 0))

    # Roofline hint for the XLA scheduler.
    dims_pad = [din_pad] + [_LANE] * 7 + [din_pad]
    flops = 2 * batch_pad * sum(dims_pad[i] * dims_pad[i + 1] for i in range(8))
    bytes_accessed = batch_pad * din_pad * (in_isize + out_isize) + param_bytes
    cost = pl.CostEstimate(flops=int(flops),
                           transcendentals=int(2 * batch_pad * din_pad),
                           bytes_accessed=int(bytes_accessed))

    vmem_limit = param_bytes * weight_bufs + tile_b * row_bytes + (4 << 20)
    vmem_limit = int(min(max(vmem_limit, 16 << 20), budget))

    out = pl.pallas_call(
        _mlp_ae_kernel,
        out_shape=jax.ShapeDtypeStruct((batch_pad, din_pad), out_dtype),
        grid=(batch_pad // tile_b,),
        in_specs=in_specs,
        out_specs=out_spec,
        compiler_params=pltpu.CompilerParams(
            dimension_semantics=("parallel",),   # shards batch tiles across v7x's 2 TCs
            vmem_limit_bytes=vmem_limit,
        ),
        cost_estimate=cost,
    )(*flat)

    if needs_pad:
        out = out[:batch, :input_dim]
    return out


_HAS_BUFFERED = hasattr(pl, "Buffered")


def mlp_autoencoder(x, prepped_params, tile_b: int = _DEFAULT_TILE_B, out_dtype=jnp.bfloat16):
    """Fused MLPAutoEncoder forward. bf16 output by default (cast outside if f32 is needed).
    Tries single-buffered weight specs first; falls back to default double-buffering if this
    JAX build rejects pipeline_mode=pl.Buffered(1), so it always compiles and runs."""
    if _HAS_BUFFERED:
        try:
            return _mlp_ae_forward(x, prepped_params, tile_b=tile_b, out_dtype=out_dtype,
                                   single_buffer_weights=True)
        except Exception:
            pass
    return _mlp_ae_forward(x, prepped_params, tile_b=tile_b, out_dtype=out_dtype,
                           single_buffer_weights=False)


# --------------------------------------------------------------------------------------
# Pure-JAX reference (same bf16-operand / f32-accumulate numerics) and self-test
# --------------------------------------------------------------------------------------
def _reference(x, params):
    h = x.astype(jnp.bfloat16)
    for i, (w, b) in enumerate(params):
        y = jnp.dot(h, w.astype(jnp.bfloat16),
                    preferred_element_type=jnp.float32) + b.astype(jnp.float32)
        if i in (0, 1, 2, 4, 5, 6):
            y = jnp.maximum(y, 0.0)
        h = y.astype(jnp.bfloat16) if i < 7 else y
    return jax.nn.sigmoid(h)


if __name__ == "__main__":
    key = jax.random.PRNGKey(0)
    k_x, k_p = jax.random.split(key)

    batch, input_dim, hidden_dim = 8, 16, 32
    x = jax.random.normal(k_x, (batch, input_dim), jnp.float32)
    params = init_params(k_p, input_dim, hidden_dim)
    prepped = prepare_params(params)

    out = mlp_autoencoder(x, prepped)          # bf16 output
    jax.block_until_ready(out)

    ref = _reference(x, params)
    assert out.shape == (batch, input_dim), out.shape
    err = float(jnp.max(jnp.abs(out.astype(jnp.float32) - ref)))
    # bf16 MXU operands + bf16 output of a [0,1] sigmoid -> small absolute error.
    assert err < 2e-2, err
    print("KERNEL_OK")
</pallas_src>

<mosaic_0001>
module attributes {stable_mosaic.version = 11 : i64} {
  func.func @_mlp_ae_kernel(%arg0: i32, %arg1: memref<16x128xbf16, #tpu.memory_space<vmem>>, %arg2: memref<128x128xbf16, #tpu.memory_space<vmem>>, %arg3: memref<1x128xf32, #tpu.memory_space<vmem>>, %arg4: memref<128x128xbf16, #tpu.memory_space<vmem>>, %arg5: memref<1x128xf32, #tpu.memory_space<vmem>>, %arg6: memref<128x128xbf16, #tpu.memory_space<vmem>>, %arg7: memref<1x128xf32, #tpu.memory_space<vmem>>, %arg8: memref<128x128xbf16, #tpu.memory_space<vmem>>, %arg9: memref<1x128xf32, #tpu.memory_space<vmem>>, %arg10: memref<128x128xbf16, #tpu.memory_space<vmem>>, %arg11: memref<1x128xf32, #tpu.memory_space<vmem>>, %arg12: memref<128x128xbf16, #tpu.memory_space<vmem>>, %arg13: memref<1x128xf32, #tpu.memory_space<vmem>>, %arg14: memref<128x128xbf16, #tpu.memory_space<vmem>>, %arg15: memref<1x128xf32, #tpu.memory_space<vmem>>, %arg16: memref<128x128xbf16, #tpu.memory_space<vmem>>, %arg17: memref<1x128xf32, #tpu.memory_space<vmem>>, %arg18: memref<16x128xbf16, #tpu.memory_space<vmem>>) attributes {dimension_semantics = [#tpu.dimension_semantics<parallel>], iteration_bounds = array<i64: 1>, scalar_prefetch = 0 : i64, scratch_operands = 0 : i64, tpu.core_type = #tpu.core_type<tc>, window_params = [{transform_indices = @transform_0, window_bounds = array<i64: 16, 128>}, {pipeline_mode = #tpu.pipeline_mode<synchronous>, transform_indices = @transform_1, window_bounds = array<i64: 128, 128>}, {pipeline_mode = #tpu.pipeline_mode<synchronous>, transform_indices = @transform_2, window_bounds = array<i64: 1, 128>}, {pipeline_mode = #tpu.pipeline_mode<synchronous>, transform_indices = @transform_3, window_bounds = array<i64: 128, 128>}, {pipeline_mode = #tpu.pipeline_mode<synchronous>, transform_indices = @transform_4, window_bounds = array<i64: 1, 128>}, {pipeline_mode = #tpu.pipeline_mode<synchronous>, transform_indices = @transform_5, window_bounds = array<i64: 128, 128>}, {pipeline_mode = #tpu.pipeline_mode<synchronous>, transform_indices = @transform_6, window_bounds = array<i64: 1, 128>}, {pipeline_mode = #tpu.pipeline_mode<synchronous>, transform_indices = @transform_7, window_bounds = array<i64: 128, 128>}, {pipeline_mode = #tpu.pipeline_mode<synchronous>, transform_indices = @transform_8, window_bounds = array<i64: 1, 128>}, {pipeline_mode = #tpu.pipeline_mode<synchronous>, transform_indices = @transform_9, window_bounds = array<i64: 128, 128>}, {pipeline_mode = #tpu.pipeline_mode<synchronous>, transform_indices = @transform_10, window_bounds = array<i64: 1, 128>}, {pipeline_mode = #tpu.pipeline_mode<synchronous>, transform_indices = @transform_11, window_bounds = array<i64: 128, 128>}, {pipeline_mode = #tpu.pipeline_mode<synchronous>, transform_indices = @transform_12, window_bounds = array<i64: 1, 128>}, {pipeline_mode = #tpu.pipeline_mode<synchronous>, transform_indices = @transform_13, window_bounds = array<i64: 128, 128>}, {pipeline_mode = #tpu.pipeline_mode<synchronous>, transform_indices = @transform_14, window_bounds = array<i64: 1, 128>}, {pipeline_mode = #tpu.pipeline_mode<synchronous>, transform_indices = @transform_15, window_bounds = array<i64: 128, 128>}, {pipeline_mode = #tpu.pipeline_mode<synchronous>, transform_indices = @transform_16, window_bounds = array<i64: 1, 128>}, {transform_indices = @transform_17, window_bounds = array<i64: 16, 128>}]} {
    %c0 = arith.constant 0 : index
    %c0_0 = arith.constant 0 : index
    %0 = vector.load %arg1[%c0, %c0_0] : memref<16x128xbf16, #tpu.memory_space<vmem>>, vector<16x128xbf16>
    %c0_1 = arith.constant 0 : index
    %c0_2 = arith.constant 0 : index
    %1 = vector.load %arg2[%c0_1, %c0_2] : memref<128x128xbf16, #tpu.memory_space<vmem>>, vector<128x128xbf16>
    %cst = arith.constant dense<0.000000e+00> : vector<16x128xf32>
    %2 = tpu.matmul %0, %1, %cst {dimension_numbers = #tpu.dot_dimension_numbers<[1], [0], [0], [1], [0, 0, 1, 1], [], []>} : vector<16x128xbf16>, vector<128x128xbf16>, vector<16x128xf32> -> vector<16x128xf32>
    %c0_3 = arith.constant 0 : index
    %c0_4 = arith.constant 0 : index
    %3 = vector.load %arg3[%c0_3, %c0_4] : memref<1x128xf32, #tpu.memory_space<vmem>>, vector<1x128xf32>
    %4 = vector.broadcast %3 : vector<1x128xf32> to vector<16x128xf32>
    %5 = arith.addf %2, %4 : vector<16x128xf32>
    %cst_5 = arith.constant 0.000000e+00 : f32
    %6 = vector.broadcast %cst_5 : f32 to vector<16x128xf32>
    %7 = arith.maximumf %5, %6 : vector<16x128xf32>
    %8 = arith.truncf %7 : vector<16x128xf32> to vector<16x128xbf16>
    %c0_6 = arith.constant 0 : index
    %c0_7 = arith.constant 0 : index
    %9 = vector.load %arg4[%c0_6, %c0_7] : memref<128x128xbf16, #tpu.memory_space<vmem>>, vector<128x128xbf16>
    %cst_8 = arith.constant dense<0.000000e+00> : vector<16x128xf32>
    %10 = tpu.matmul %8, %9, %cst_8 {dimension_numbers = #tpu.dot_dimension_numbers<[1], [0], [0], [1], [0, 0, 1, 1], [], []>} : vector<16x128xbf16>, vector<128x128xbf16>, vector<16x128xf32> -> vector<16x128xf32>
    %c0_9 = arith.constant 0 : index
    %c0_10 = arith.constant 0 : index
    %11 = vector.load %arg5[%c0_9, %c0_10] : memref<1x128xf32, #tpu.memory_space<vmem>>, vector<1x128xf32>
    %12 = vector.broadcast %11 : vector<1x128xf32> to vector<16x128xf32>
    %13 = arith.addf %10, %12 : vector<16x128xf32>
    %cst_11 = arith.constant 0.000000e+00 : f32
    %14 = vector.broadcast %cst_11 : f32 to vector<16x128xf32>
    %15 = arith.maximumf %13, %14 : vector<16x128xf32>
    %16 = arith.truncf %15 : vector<16x128xf32> to vector<16x128xbf16>
    %c0_12 = arith.constant 0 : index
    %c0_13 = arith.constant 0 : index
    %17 = vector.load %arg6[%c0_12, %c0_13] : memref<128x128xbf16, #tpu.memory_space<vmem>>, vector<128x128xbf16>
    %cst_14 = arith.constant dense<0.000000e+00> : vector<16x128xf32>
    %18 = tpu.matmul %16, %17, %cst_14 {dimension_numbers = #tpu.dot_dimension_numbers<[1], [0], [0], [1], [0, 0, 1, 1], [], []>} : vector<16x128xbf16>, vector<128x128xbf16>, vector<16x128xf32> -> vector<16x128xf32>
    %c0_15 = arith.constant 0 : index
    %c0_16 = arith.constant 0 : index
    %19 = vector.load %arg7[%c0_15, %c0_16] : memref<1x128xf32, #tpu.memory_space<vmem>>, vector<1x128xf32>
    %20 = vector.broadcast %19 : vector<1x128xf32> to vector<16x128xf32>
    %21 = arith.addf %18, %20 : vector<16x128xf32>
    %cst_17 = arith.constant 0.000000e+00 : f32
    %22 = vector.broadcast %cst_17 : f32 to vector<16x128xf32>
    %23 = arith.maximumf %21, %22 : vector<16x128xf32>
    %24 = arith.truncf %23 : vector<16x128xf32> to vector<16x128xbf16>
    %c0_18 = arith.constant 0 : index
    %c0_19 = arith.constant 0 : index
    %25 = vector.load %arg8[%c0_18, %c0_19] : memref<128x128xbf16, #tpu.memory_space<vmem>>, vector<128x128xbf16>
    %cst_20 = arith.constant dense<0.000000e+00> : vector<16x128xf32>
    %26 = tpu.matmul %24, %25, %cst_20 {dimension_numbers = #tpu.dot_dimension_numbers<[1], [0], [0], [1], [0, 0, 1, 1], [], []>} : vector<16x128xbf16>, vector<128x128xbf16>, vector<16x128xf32> -> vector<16x128xf32>
    %c0_21 = arith.constant 0 : index
    %c0_22 = arith.constant 0 : index
    %27 = vector.load %arg9[%c0_21, %c0_22] : memref<1x128xf32, #tpu.memory_space<vmem>>, vector<1x128xf32>
    %28 = vector.broadcast %27 : vector<1x128xf32> to vector<16x128xf32>
    %29 = arith.addf %26, %28 : vector<16x128xf32>
    %30 = arith.truncf %29 : vector<16x128xf32> to vector<16x128xbf16>
    %c0_23 = arith.constant 0 : index
    %c0_24 = arith.constant 0 : index
    %31 = vector.load %arg10[%c0_23, %c0_24] : memref<128x128xbf16, #tpu.memory_space<vmem>>, vector<128x128xbf16>
    %cst_25 = arith.constant dense<0.000000e+00> : vector<16x128xf32>
    %32 = tpu.matmul %30, %31, %cst_25 {dimension_numbers = #tpu.dot_dimension_numbers<[1], [0], [0], [1], [0, 0, 1, 1], [], []>} : vector<16x128xbf16>, vector<128x128xbf16>, vector<16x128xf32> -> vector<16x128xf32>
    %c0_26 = arith.constant 0 : index
    %c0_27 = arith.constant 0 : index
    %33 = vector.load %arg11[%c0_26, %c0_27] : memref<1x128xf32, #tpu.memory_space<vmem>>, vector<1x128xf32>
    %34 = vector.broadcast %33 : vector<1x128xf32> to vector<16x128xf32>
    %35 = arith.addf %32, %34 : vector<16x128xf32>
    %cst_28 = arith.constant 0.000000e+00 : f32
    %36 = vector.broadcast %cst_28 : f32 to vector<16x128xf32>
    %37 = arith.maximumf %35, %36 : vector<16x128xf32>
    %38 = arith.truncf %37 : vector<16x128xf32> to vector<16x128xbf16>
    %c0_29 = arith.constant 0 : index
    %c0_30 = arith.constant 0 : index
    %39 = vector.load %arg12[%c0_29, %c0_30] : memref<128x128xbf16, #tpu.memory_space<vmem>>, vector<128x128xbf16>
    %cst_31 = arith.constant dense<0.000000e+00> : vector<16x128xf32>
    %40 = tpu.matmul %38, %39, %cst_31 {dimension_numbers = #tpu.dot_dimension_numbers<[1], [0], [0], [1], [0, 0, 1, 1], [], []>} : vector<16x128xbf16>, vector<128x128xbf16>, vector<16x128xf32> -> vector<16x128xf32>
    %c0_32 = arith.constant 0 : index
    %c0_33 = arith.constant 0 : index
    %41 = vector.load %arg13[%c0_32, %c0_33] : memref<1x128xf32, #tpu.memory_space<vmem>>, vector<1x128xf32>
    %42 = vector.broadcast %41 : vector<1x128xf32> to vector<16x128xf32>
    %43 = arith.addf %40, %42 : vector<16x128xf32>
    %cst_34 = arith.constant 0.000000e+00 : f32
    %44 = vector.broadcast %cst_34 : f32 to vector<16x128xf32>
    %45 = arith.maximumf %43, %44 : vector<16x128xf32>
    %46 = arith.truncf %45 : vector<16x128xf32> to vector<16x128xbf16>
    %c0_35 = arith.constant 0 : index
    %c0_36 = arith.constant 0 : index
    %47 = vector.load %arg14[%c0_35, %c0_36] : memref<128x128xbf16, #tpu.memory_space<vmem>>, vector<128x128xbf16>
    %cst_37 = arith.constant dense<0.000000e+00> : vector<16x128xf32>
    %48 = tpu.matmul %46, %47, %cst_37 {dimension_numbers = #tpu.dot_dimension_numbers<[1], [0], [0], [1], [0, 0, 1, 1], [], []>} : vector<16x128xbf16>, vector<128x128xbf16>, vector<16x128xf32> -> vector<16x128xf32>
    %c0_38 = arith.constant 0 : index
    %c0_39 = arith.constant 0 : index
    %49 = vector.load %arg15[%c0_38, %c0_39] : memref<1x128xf32, #tpu.memory_space<vmem>>, vector<1x128xf32>
    %50 = vector.broadcast %49 : vector<1x128xf32> to vector<16x128xf32>
    %51 = arith.addf %48, %50 : vector<16x128xf32>
    %cst_40 = arith.constant 0.000000e+00 : f32
    %52 = vector.broadcast %cst_40 : f32 to vector<16x128xf32>
    %53 = arith.maximumf %51, %52 : vector<16x128xf32>
    %54 = arith.truncf %53 : vector<16x128xf32> to vector<16x128xbf16>
    %c0_41 = arith.constant 0 : index
    %c0_42 = arith.constant 0 : index
    %55 = vector.load %arg16[%c0_41, %c0_42] : memref<128x128xbf16, #tpu.memory_space<vmem>>, vector<128x128xbf16>
    %cst_43 = arith.constant dense<0.000000e+00> : vector<16x128xf32>
    %56 = tpu.matmul %54, %55, %cst_43 {dimension_numbers = #tpu.dot_dimension_numbers<[1], [0], [0], [1], [0, 0, 1, 1], [], []>} : vector<16x128xbf16>, vector<128x128xbf16>, vector<16x128xf32> -> vector<16x128xf32>
    %c0_44 = arith.constant 0 : index
    %c0_45 = arith.constant 0 : index
    %57 = vector.load %arg17[%c0_44, %c0_45] : memref<1x128xf32, #tpu.memory_space<vmem>>, vector<1x128xf32>
    %58 = vector.broadcast %57 : vector<1x128xf32> to vector<16x128xf32>
    %59 = arith.addf %56, %58 : vector<16x128xf32>
    %cst_46 = arith.constant 0.000000e+00 : f32
    %60 = vector.broadcast %cst_46 : f32 to vector<16x128xf32>
    %61 = arith.subf %60, %59 : vector<16x128xf32>
    %62 = math.exp %61 : vector<16x128xf32>
    %cst_47 = arith.constant 1.000000e+00 : f32
    %63 = vector.broadcast %cst_47 : f32 to vector<16x128xf32>
    %64 = arith.addf %63, %62 : vector<16x128xf32>
    %65 = tpu.reciprocal %64 : vector<16x128xf32> -> vector<16x128xf32>
    %66 = arith.truncf %65 : vector<16x128xf32> to vector<16x128xbf16>
    %c0_48 = arith.constant 0 : index
    %c0_49 = arith.constant 0 : index
    %67 = vector.load %arg18[%c0_48, %c0_49] : memref<16x128xbf16, #tpu.memory_space<vmem>>, vector<16x128xbf16>
    tpu.vector_store %arg18[%c0_48, %c0_49], %66 {strides = array<i32>} : memref<16x128xbf16, #tpu.memory_space<vmem>>, vector<16x128xbf16>,
    return
  }
  func.func @transform_0(%arg0: i32) -> (i32, i32) {
    %c0_i32 = arith.constant 0 : i32
    %c0_i32_0 = arith.constant 0 : i32
    return %arg0, %c0_i32 : i32, i32
  }
  func.func @transform_1(%arg0: i32) -> (i32, i32) {
    %c0_i32 = arith.constant 0 : i32
    %c0_i32_0 = arith.constant 0 : i32
    %c0_i32_1 = arith.constant 0 : i32
    return %c0_i32, %c0_i32_0 : i32, i32
  }
  func.func @transform_2(%arg0: i32) -> (i32, i32) {
    %c0_i32 = arith.constant 0 : i32
    %c0_i32_0 = arith.constant 0 : i32
    %c0_i32_1 = arith.constant 0 : i32
    return %c0_i32, %c0_i32_0 : i32, i32
  }
  func.func @transform_3(%arg0: i32) -> (i32, i32) {
    %c0_i32 = arith.constant 0 : i32
    %c0_i32_0 = arith.constant 0 : i32
    %c0_i32_1 = arith.constant 0 : i32
    return %c0_i32, %c0_i32_0 : i32, i32
  }
  func.func @transform_4(%arg0: i32) -> (i32, i32) {
    %c0_i32 = arith.constant 0 : i32
    %c0_i32_0 = arith.constant 0 : i32
    %c0_i32_1 = arith.constant 0 : i32
    return %c0_i32, %c0_i32_0 : i32, i32
  }
  func.func @transform_5(%arg0: i32) -> (i32, i32) {
    %c0_i32 = arith.constant 0 : i32
    %c0_i32_0 = arith.constant 0 : i32
    %c0_i32_1 = arith.constant 0 : i32
    return %c0_i32, %c0_i32_0 : i32, i32
  }
  func.func @transform_6(%arg0: i32) -> (i32, i32) {
    %c0_i32 = arith.constant 0 : i32
    %c0_i32_0 = arith.constant 0 : i32
    %c0_i32_1 = arith.constant 0 : i32
    return %c0_i32, %c0_i32_0 : i32, i32
  }
  func.func @transform_7(%arg0: i32) -> (i32, i32) {
    %c0_i32 = arith.constant 0 : i32
    %c0_i32_0 = arith.constant 0 : i32
    %c0_i32_1 = arith.constant 0 : i32
    return %c0_i32, %c0_i32_0 : i32, i32
  }
  func.func @transform_8(%arg0: i32) -> (i32, i32) {
    %c0_i32 = arith.constant 0 : i32
    %c0_i32_0 = arith.constant 0 : i32
    %c0_i32_1 = arith.constant 0 : i32
    return %c0_i32, %c0_i32_0 : i32, i32
  }
  func.func @transform_9(%arg0: i32) -> (i32, i32) {
    %c0_i32 = arith.constant 0 : i32
    %c0_i32_0 = arith.constant 0 : i32
    %c0_i32_1 = arith.constant 0 : i32
    return %c0_i32, %c0_i32_0 : i32, i32
  }
  func.func @transform_10(%arg0: i32) -> (i32, i32) {
    %c0_i32 = arith.constant 0 : i32
    %c0_i32_0 = arith.constant 0 : i32
    %c0_i32_1 = arith.constant 0 : i32
    return %c0_i32, %c0_i32_0 : i32, i32
  }
  func.func @transform_11(%arg0: i32) -> (i32, i32) {
    %c0_i32 = arith.constant 0 : i32
    %c0_i32_0 = arith.constant 0 : i32
    %c0_i32_1 = arith.constant 0 : i32
    return %c0_i32, %c0_i32_0 : i32, i32
  }
  func.func @transform_12(%arg0: i32) -> (i32, i32) {
    %c0_i32 = arith.constant 0 : i32
    %c0_i32_0 = arith.constant 0 : i32
    %c0_i32_1 = arith.constant 0 : i32
    return %c0_i32, %c0_i32_0 : i32, i32
  }
  func.func @transform_13(%arg0: i32) -> (i32, i32) {
    %c0_i32 = arith.constant 0 : i32
    %c0_i32_0 = arith.constant 0 : i32
    %c0_i32_1 = arith.constant 0 : i32
    return %c0_i32, %c0_i32_0 : i32, i32
  }
  func.func @transform_14(%arg0: i32) -> (i32, i32) {
    %c0_i32 = arith.constant 0 : i32
    %c0_i32_0 = arith.constant 0 : i32
    %c0_i32_1 = arith.constant 0 : i32
    return %c0_i32, %c0_i32_0 : i32, i32
  }
  func.func @transform_15(%arg0: i32) -> (i32, i32) {
    %c0_i32 = arith.constant 0 : i32
    %c0_i32_0 = arith.constant 0 : i32
    %c0_i32_1 = arith.constant 0 : i32
    return %c0_i32, %c0_i32_0 : i32, i32
  }
  func.func @transform_16(%arg0: i32) -> (i32, i32) {
    %c0_i32 = arith.constant 0 : i32
    %c0_i32_0 = arith.constant 0 : i32
    %c0_i32_1 = arith.constant 0 : i32
    return %c0_i32, %c0_i32_0 : i32, i32
  }
  func.func @transform_17(%arg0: i32) -> (i32, i32) {
    %c0_i32 = arith.constant 0 : i32
    %c0_i32_0 = arith.constant 0 : i32
    return %arg0, %c0_i32 : i32, i32
  }
}

module attributes {stable_mosaic.version = 11 : i64} {
  func.func @_mlp_ae_kernel(%arg0: i32, %arg1: memref<16x128xbf16, #tpu.memory_space<vmem>>, %arg2: memref<128x128xbf16, #tpu.memory_space<vmem>>, %arg3: memref<1x128xf32, #tpu.memory_space<vmem>>, %arg4: memref<128x128xbf16, #tpu.memory_space<vmem>>, %arg5: memref<1x128xf32, #tpu.memory_space<vmem>>, %arg6: memref<128x128xbf16, #tpu.memory_space<vmem>>, %arg7: memref<1x128xf32, #tpu.memory_space<vmem>>, %arg8: memref<128x128xbf16, #tpu.memory_space<vmem>>, %arg9: memref<1x128xf32, #tpu.memory_space<vmem>>, %arg10: memref<128x128xbf16, #tpu.memory_space<vmem>>, %arg11: memref<1x128xf32, #tpu.memory_space<vmem>>, %arg12: memref<128x128xbf16, #tpu.memory_space<vmem>>, %arg13: memref<1x128xf32, #tpu.memory_space<vmem>>, %arg14: memref<128x128xbf16, #tpu.memory_space<vmem>>, %arg15: memref<1x128xf32, #tpu.memory_space<vmem>>, %arg16: memref<128x128xbf16, #tpu.memory_space<vmem>>, %arg17: memref<1x128xf32, #tpu.memory_space<vmem>>, %arg18: memref<16x128xbf16, #tpu.memory_space<vmem>>) attributes {dimension_semantics = [#tpu.dimension_semantics<parallel>], iteration_bounds = array<i64: 1>, scalar_prefetch = 0 : i64, scratch_operands = 0 : i64, tpu.core_type = #tpu.core_type<tc>, window_params = [{transform_indices = @transform_0, window_bounds = array<i64: 16, 128>}, {pipeline_mode = #tpu.pipeline_mode<synchronous>, transform_indices = @transform_1, window_bounds = array<i64: 128, 128>}, {pipeline_mode = #tpu.pipeline_mode<synchronous>, transform_indices = @transform_2, window_bounds = array<i64: 1, 128>}, {pipeline_mode = #tpu.pipeline_mode<synchronous>, transform_indices = @transform_3, window_bounds = array<i64: 128, 128>}, {pipeline_mode = #tpu.pipeline_mode<synchronous>, transform_indices = @transform_4, window_bounds = array<i64: 1, 128>}, {pipeline_mode = #tpu.pipeline_mode<synchronous>, transform_indices = @transform_5, window_bounds = array<i64: 128, 128>}, {pipeline_mode = #tpu.pipeline_mode<synchronous>, transform_indices = @transform_6, window_bounds = array<i64: 1, 128>}, {pipeline_mode = #tpu.pipeline_mode<synchronous>, transform_indices = @transform_7, window_bounds = array<i64: 128, 128>}, {pipeline_mode = #tpu.pipeline_mode<synchronous>, transform_indices = @transform_8, window_bounds = array<i64: 1, 128>}, {pipeline_mode = #tpu.pipeline_mode<synchronous>, transform_indices = @transform_9, window_bounds = array<i64: 128, 128>}, {pipeline_mode = #tpu.pipeline_mode<synchronous>, transform_indices = @transform_10, window_bounds = array<i64: 1, 128>}, {pipeline_mode = #tpu.pipeline_mode<synchronous>, transform_indices = @transform_11, window_bounds = array<i64: 128, 128>}, {pipeline_mode = #tpu.pipeline_mode<synchronous>, transform_indices = @transform_12, window_bounds = array<i64: 1, 128>}, {pipeline_mode = #tpu.pipeline_mode<synchronous>, transform_indices = @transform_13, window_bounds = array<i64: 128, 128>}, {pipeline_mode = #tpu.pipeline_mode<synchronous>, transform_indices = @transform_14, window_bounds = array<i64: 1, 128>}, {pipeline_mode = #tpu.pipeline_mode<synchronous>, transform_indices = @transform_15, window_bounds = array<i64: 128, 128>}, {pipeline_mode = #tpu.pipeline_mode<synchronous>, transform_indices = @transform_16, window_bounds = array<i64: 1, 128>}, {transform_indices = @transform_17, window_bounds = array<i64: 16, 128>}]} {
    %c0 = arith.constant 0 : index
    %c0_0 = arith.constant 0 : index
    %0 = vector.load %arg1[%c0, %c0_0] : memref<16x128xbf16, #tpu.memory_space<vmem>>, vector<16x128xbf16>
    %c0_1 = arith.constant 0 : index
    %c0_2 = arith.constant 0 : index
    %1 = vector.load %arg2[%c0_1, %c0_2] : memref<128x128xbf16, #tpu.memory_space<vmem>>, vector<128x128xbf16>
    %cst = arith.constant dense<0.000000e+00> : vector<16x128xf32>
    %2 = tpu.matmul %0, %1, %cst {dimension_numbers = #tpu.dot_dimension_numbers<[1], [0], [0], [1], [0, 0, 1, 1], [], []>} : vector<16x128xbf16>, vector<128x128xbf16>, vector<16x128xf32> -> vector<16x128xf32>
    %c0_3 = arith.constant 0 : index
    %c0_4 = arith.constant 0 : index
    %3 = vector.load %arg3[%c0_3, %c0_4] : memref<1x128xf32, #tpu.memory_space<vmem>>, vector<1x128xf32>
    %4 = vector.broadcast %3 : vector<1x128xf32> to vector<16x128xf32>
    %5 = arith.addf %2, %4 : vector<16x128xf32>
    %cst_5 = arith.constant 0.000000e+00 : f32
    %6 = vector.broadcast %cst_5 : f32 to vector<16x128xf32>
    %7 = arith.maximumf %5, %6 : vector<16x128xf32>
    %8 = arith.truncf %7 : vector<16x128xf32> to vector<16x128xbf16>
    %c0_6 = arith.constant 0 : index
    %c0_7 = arith.constant 0 : index
    %9 = vector.load %arg4[%c0_6, %c0_7] : memref<128x128xbf16, #tpu.memory_space<vmem>>, vector<128x128xbf16>
    %cst_8 = arith.constant dense<0.000000e+00> : vector<16x128xf32>
    %10 = tpu.matmul %8, %9, %cst_8 {dimension_numbers = #tpu.dot_dimension_numbers<[1], [0], [0], [1], [0, 0, 1, 1], [], []>} : vector<16x128xbf16>, vector<128x128xbf16>, vector<16x128xf32> -> vector<16x128xf32>
    %c0_9 = arith.constant 0 : index
    %c0_10 = arith.constant 0 : index
    %11 = vector.load %arg5[%c0_9, %c0_10] : memref<1x128xf32, #tpu.memory_space<vmem>>, vector<1x128xf32>
    %12 = vector.broadcast %11 : vector<1x128xf32> to vector<16x128xf32>
    %13 = arith.addf %10, %12 : vector<16x128xf32>
    %cst_11 = arith.constant 0.000000e+00 : f32
    %14 = vector.broadcast %cst_11 : f32 to vector<16x128xf32>
    %15 = arith.maximumf %13, %14 : vector<16x128xf32>
    %16 = arith.truncf %15 : vector<16x128xf32> to vector<16x128xbf16>
    %c0_12 = arith.constant 0 : index
    %c0_13 = arith.constant 0 : index
    %17 = vector.load %arg6[%c0_12, %c0_13] : memref<128x128xbf16, #tpu.memory_space<vmem>>, vector<128x128xbf16>
    %cst_14 = arith.constant dense<0.000000e+00> : vector<16x128xf32>
    %18 = tpu.matmul %16, %17, %cst_14 {dimension_numbers = #tpu.dot_dimension_numbers<[1], [0], [0], [1], [0, 0, 1, 1], [], []>} : vector<16x128xbf16>, vector<128x128xbf16>, vector<16x128xf32> -> vector<16x128xf32>
    %c0_15 = arith.constant 0 : index
    %c0_16 = arith.constant 0 : index
    %19 = vector.load %arg7[%c0_15, %c0_16] : memref<1x128xf32, #tpu.memory_space<vmem>>, vector<1x128xf32>
    %20 = vector.broadcast %19 : vector<1x128xf32> to vector<16x128xf32>
    %21 = arith.addf %18, %20 : vector<16x128xf32>
    %cst_17 = arith.constant 0.000000e+00 : f32
    %22 = vector.broadcast %cst_17 : f32 to vector<16x128xf32>
    %23 = arith.maximumf %21, %22 : vector<16x128xf32>
    %24 = arith.truncf %23 : vector<16x128xf32> to vector<16x128xbf16>
    %c0_18 = arith.constant 0 : index
    %c0_19 = arith.constant 0 : index
    %25 = vector.load %arg8[%c0_18, %c0_19] : memref<128x128xbf16, #tpu.memory_space<vmem>>, vector<128x128xbf16>
    %cst_20 = arith.constant dense<0.000000e+00> : vector<16x128xf32>
    %26 = tpu.matmul %24, %25, %cst_20 {dimension_numbers = #tpu.dot_dimension_numbers<[1], [0], [0], [1], [0, 0, 1, 1], [], []>} : vector<16x128xbf16>, vector<128x128xbf16>, vector<16x128xf32> -> vector<16x128xf32>
    %c0_21 = arith.constant 0 : index
    %c0_22 = arith.constant 0 : index
    %27 = vector.load %arg9[%c0_21, %c0_22] : memref<1x128xf32, #tpu.memory_space<vmem>>, vector<1x128xf32>
    %28 = vector.broadcast %27 : vector<1x128xf32> to vector<16x128xf32>
    %29 = arith.addf %26, %28 : vector<16x128xf32>
    %30 = arith.truncf %29 : vector<16x128xf32> to vector<16x128xbf16>
    %c0_23 = arith.constant 0 : index
    %c0_24 = arith.constant 0 : index
    %31 = vector.load %arg10[%c0_23, %c0_24] : memref<128x128xbf16, #tpu.memory_space<vmem>>, vector<128x128xbf16>
    %cst_25 = arith.constant dense<0.000000e+00> : vector<16x128xf32>
    %32 = tpu.matmul %30, %31, %cst_25 {dimension_numbers = #tpu.dot_dimension_numbers<[1], [0], [0], [1], [0, 0, 1, 1], [], []>} : vector<16x128xbf16>, vector<128x128xbf16>, vector<16x128xf32> -> vector<16x128xf32>
    %c0_26 = arith.constant 0 : index
    %c0_27 = arith.constant 0 : index
    %33 = vector.load %arg11[%c0_26, %c0_27] : memref<1x128xf32, #tpu.memory_space<vmem>>, vector<1x128xf32>
    %34 = vector.broadcast %33 : vector<1x128xf32> to vector<16x128xf32>
    %35 = arith.addf %32, %34 : vector<16x128xf32>
    %cst_28 = arith.constant 0.000000e+00 : f32
    %36 = vector.broadcast %cst_28 : f32 to vector<16x128xf32>
    %37 = arith.maximumf %35, %36 : vector<16x128xf32>
    %38 = arith.truncf %37 : vector<16x128xf32> to vector<16x128xbf16>
    %c0_29 = arith.constant 0 : index
    %c0_30 = arith.constant 0 : index
    %39 = vector.load %arg12[%c0_29, %c0_30] : memref<128x128xbf16, #tpu.memory_space<vmem>>, vector<128x128xbf16>
    %cst_31 = arith.constant dense<0.000000e+00> : vector<16x128xf32>
    %40 = tpu.matmul %38, %39, %cst_31 {dimension_numbers = #tpu.dot_dimension_numbers<[1], [0], [0], [1], [0, 0, 1, 1], [], []>} : vector<16x128xbf16>, vector<128x128xbf16>, vector<16x128xf32> -> vector<16x128xf32>
    %c0_32 = arith.constant 0 : index
    %c0_33 = arith.constant 0 : index
    %41 = vector.load %arg13[%c0_32, %c0_33] : memref<1x128xf32, #tpu.memory_space<vmem>>, vector<1x128xf32>
    %42 = vector.broadcast %41 : vector<1x128xf32> to vector<16x128xf32>
    %43 = arith.addf %40, %42 : vector<16x128xf32>
    %cst_34 = arith.constant 0.000000e+00 : f32
    %44 = vector.broadcast %cst_34 : f32 to vector<16x128xf32>
    %45 = arith.maximumf %43, %44 : vector<16x128xf32>
    %46 = arith.truncf %45 : vector<16x128xf32> to vector<16x128xbf16>
    %c0_35 = arith.constant 0 : index
    %c0_36 = arith.constant 0 : index
    %47 = vector.load %arg14[%c0_35, %c0_36] : memref<128x128xbf16, #tpu.memory_space<vmem>>, vector<128x128xbf16>
    %cst_37 = arith.constant dense<0.000000e+00> : vector<16x128xf32>
    %48 = tpu.matmul %46, %47, %cst_37 {dimension_numbers = #tpu.dot_dimension_numbers<[1], [0], [0], [1], [0, 0, 1, 1], [], []>} : vector<16x128xbf16>, vector<128x128xbf16>, vector<16x128xf32> -> vector<16x128xf32>
    %c0_38 = arith.constant 0 : index
    %c0_39 = arith.constant 0 : index
    %49 = vector.load %arg15[%c0_38, %c0_39] : memref<1x128xf32, #tpu.memory_space<vmem>>, vector<1x128xf32>
    %50 = vector.broadcast %49 : vector<1x128xf32> to vector<16x128xf32>
    %51 = arith.addf %48, %50 : vector<16x128xf32>
    %cst_40 = arith.constant 0.000000e+00 : f32
    %52 = vector.broadcast %cst_40 : f32 to vector<16x128xf32>
    %53 = arith.maximumf %51, %52 : vector<16x128xf32>
    %54 = arith.truncf %53 : vector<16x128xf32> to vector<16x128xbf16>
    %c0_41 = arith.constant 0 : index
    %c0_42 = arith.constant 0 : index
    %55 = vector.load %arg16[%c0_41, %c0_42] : memref<128x128xbf16, #tpu.memory_space<vmem>>, vector<128x128xbf16>
    %cst_43 = arith.constant dense<0.000000e+00> : vector<16x128xf32>
    %56 = tpu.matmul %54, %55, %cst_43 {dimension_numbers = #tpu.dot_dimension_numbers<[1], [0], [0], [1], [0, 0, 1, 1], [], []>} : vector<16x128xbf16>, vector<128x128xbf16>, vector<16x128xf32> -> vector<16x128xf32>
    %c0_44 = arith.constant 0 : index
    %c0_45 = arith.constant 0 : index
    %57 = vector.load %arg17[%c0_44, %c0_45] : memref<1x128xf32, #tpu.memory_space<vmem>>, vector<1x128xf32>
    %58 = vector.broadcast %57 : vector<1x128xf32> to vector<16x128xf32>
    %59 = arith.addf %56, %58 : vector<16x128xf32>
    %cst_46 = arith.constant 0.000000e+00 : f32
    %60 = vector.broadcast %cst_46 : f32 to vector<16x128xf32>
    %61 = arith.subf %60, %59 : vector<16x128xf32>
    %62 = math.exp %61 : vector<16x128xf32>
    %cst_47 = arith.constant 1.000000e+00 : f32
    %63 = vector.broadcast %cst_47 : f32 to vector<16x128xf32>
    %64 = arith.addf %63, %62 : vector<16x128xf32>
    %65 = tpu.reciprocal %64 : vector<16x128xf32> -> vector<16x128xf32>
    %66 = arith.truncf %65 : vector<16x128xf32> to vector<16x128xbf16>
    %c0_48 = arith.constant 0 : index
    %c0_49 = arith.constant 0 : index
    %67 = vector.load %arg18[%c0_48, %c0_49] : memref<16x128xbf16, #tpu.memory_space<vmem>>, vector<16x128xbf16>
    tpu.vector_store %arg18[%c0_48, %c0_49], %66 {strides = array<i32>} : memref<16x128xbf16, #tpu.memory_space<vmem>>, vector<16x128xbf16>,
    return
  }
  func.func @transform_0(%arg0: i32) -> (i32, i32) {
    %c0_i32 = arith.constant 0 : i32
    %c0_i32_0 = arith.constant 0 : i32
    return %arg0, %c0_i32 : i32, i32
  }
  func.func @transform_1(%arg0: i32) -> (i32, i32) {
    %c0_i32 = arith.constant 0 : i32
    %c0_i32_0 = arith.constant 0 : i32
    %c0_i32_1 = arith.constant 0 : i32
    return %c0_i32, %c0_i32_0 : i32, i32
  }
  func.func @transform_2(%arg0: i32) -> (i32, i32) {
    %c0_i32 = arith.constant 0 : i32
    %c0_i32_0 = arith.constant 0 : i32
    %c0_i32_1 = arith.constant 0 : i32
    return %c0_i32, %c0_i32_0 : i32, i32
  }
  func.func @transform_3(%arg0: i32) -> (i32, i32) {
    %c0_i32 = arith.constant 0 : i32
    %c0_i32_0 = arith.constant 0 : i32
    %c0_i32_1 = arith.constant 0 : i32
    return %c0_i32, %c0_i32_0 : i32, i32
  }
  func.func @transform_4(%arg0: i32) -> (i32, i32) {
    %c0_i32 = arith.constant 0 : i32
    %c0_i32_0 = arith.constant 0 : i32
    %c0_i32_1 = arith.constant 0 : i32
    return %c0_i32, %c0_i32_0 : i32, i32
  }
  func.func @transform_5(%arg0: i32) -> (i32, i32) {
    %c0_i32 = arith.constant 0 : i32
    %c0_i32_0 = arith.constant 0 : i32
    %c0_i32_1 = arith.constant 0 : i32
    return %c0_i32, %c0_i32_0 : i32, i32
  }
  func.func @transform_6(%arg0: i32) -> (i32, i32) {
    %c0_i32 = arith.constant 0 : i32
    %c0_i32_0 = arith.constant 0 : i32
    %c0_i32_1 = arith.constant 0 : i32
    return %c0_i32, %c0_i32_0 : i32, i32
  }
  func.func @transform_7(%arg0: i32) -> (i32, i32) {
    %c0_i32 = arith.constant 0 : i32
    %c0_i32_0 = arith.constant 0 : i32
    %c0_i32_1 = arith.constant 0 : i32
    return %c0_i32, %c0_i32_0 : i32, i32
  }
  func.func @transform_8(%arg0: i32) -> (i32, i32) {
    %c0_i32 = arith.constant 0 : i32
    %c0_i32_0 = arith.constant 0 : i32
    %c0_i32_1 = arith.constant 0 : i32
    return %c0_i32, %c0_i32_0 : i32, i32
  }
  func.func @transform_9(%arg0: i32) -> (i32, i32) {
    %c0_i32 = arith.constant 0 : i32
    %c0_i32_0 = arith.constant 0 : i32
    %c0_i32_1 = arith.constant 0 : i32
    return %c0_i32, %c0_i32_0 : i32, i32
  }
  func.func @transform_10(%arg0: i32) -> (i32, i32) {
    %c0_i32 = arith.constant 0 : i32
    %c0_i32_0 = arith.constant 0 : i32
    %c0_i32_1 = arith.constant 0 : i32
    return %c0_i32, %c0_i32_0 : i32, i32
  }
  func.func @transform_11(%arg0: i32) -> (i32, i32) {
    %c0_i32 = arith.constant 0 : i32
    %c0_i32_0 = arith.constant 0 : i32
    %c0_i32_1 = arith.constant 0 : i32
    return %c0_i32, %c0_i32_0 : i32, i32
  }
  func.func @transform_12(%arg0: i32) -> (i32, i32) {
    %c0_i32 = arith.constant 0 : i32
    %c0_i32_0 = arith.constant 0 : i32
    %c0_i32_1 = arith.constant 0 : i32
    return %c0_i32, %c0_i32_0 : i32, i32
  }
  func.func @transform_13(%arg0: i32) -> (i32, i32) {
    %c0_i32 = arith.constant 0 : i32
    %c0_i32_0 = arith.constant 0 : i32
    %c0_i32_1 = arith.constant 0 : i32
    return %c0_i32, %c0_i32_0 : i32, i32
  }
  func.func @transform_14(%arg0: i32) -> (i32, i32) {
    %c0_i32 = arith.constant 0 : i32
    %c0_i32_0 = arith.constant 0 : i32
    %c0_i32_1 = arith.constant 0 : i32
    return %c0_i32, %c0_i32_0 : i32, i32
  }
  func.func @transform_15(%arg0: i32) -> (i32, i32) {
    %c0_i32 = arith.constant 0 : i32
    %c0_i32_0 = arith.constant 0 : i32
    %c0_i32_1 = arith.constant 0 : i32
    return %c0_i32, %c0_i32_0 : i32, i32
  }
  func.func @transform_16(%arg0: i32) -> (i32, i32) {
    %c0_i32 = arith.constant 0 : i32
    %c0_i32_0 = arith.constant 0 : i32
    %c0_i32_1 = arith.constant 0 : i32
    return %c0_i32, %c0_i32_0 : i32, i32
  }
  func.func @transform_17(%arg0: i32) -> (i32, i32) {
    %c0_i32 = arith.constant 0 : i32
    %c0_i32_0 = arith.constant 0 : i32
    return %arg0, %c0_i32 : i32, i32
  }
}

</mosaic_0001>

<llo_original>
// kernel: _mlp_ae_forward.1
$region0: #{_mlp_ae_forward.1}
  #allocation0 [shape = 'u32[]', space=smem, size = 0x4, offset = 0x4, fixed_abs, tag = 'smem constant byte address 0x4 - core index']
  #allocation1 [shape = 'u32[72,128]{1,0:T(1,128)}', space=vmem, size = 0x9000, scoped, tag = 'internal scratch']
  %s0 = inlined_call_operand.vmem [shape: bf16[16,128], index: 0, kind: input, shape index: {}]
  %s1 = inlined_call_operand.hbm [shape: bf16[128,128], index: 1, kind: input, shape index: {}]
  %s2 = inlined_call_operand.vmem [shape: f32[1,128], index: 2, kind: input, shape index: {}]
  %s3 = inlined_call_operand.hbm [shape: bf16[128,128], index: 3, kind: input, shape index: {}]
  %s4 = inlined_call_operand.vmem [shape: f32[1,128], index: 4, kind: input, shape index: {}]
  %s5 = inlined_call_operand.hbm [shape: bf16[128,128], index: 5, kind: input, shape index: {}]
  %s6 = inlined_call_operand.vmem [shape: f32[1,128], index: 6, kind: input, shape index: {}]
  %s7 = inlined_call_operand.hbm [shape: bf16[128,128], index: 7, kind: input, shape index: {}]
  %s8 = inlined_call_operand.vmem [shape: f32[1,128], index: 8, kind: input, shape index: {}]
  %s9 = inlined_call_operand.hbm [shape: bf16[128,128], index: 9, kind: input, shape index: {}]
  %s10 = inlined_call_operand.vmem [shape: f32[1,128], index: 10, kind: input, shape index: {}]
  %s11 = inlined_call_operand.hbm [shape: bf16[128,128], index: 11, kind: input, shape index: {}]
  %s12 = inlined_call_operand.vmem [shape: f32[1,128], index: 12, kind: input, shape index: {}]
  %s13 = inlined_call_operand.hbm [shape: bf16[128,128], index: 13, kind: input, shape index: {}]
  %s14 = inlined_call_operand.vmem [shape: f32[1,128], index: 14, kind: input, shape index: {}]
  %s15 = inlined_call_operand.hbm [shape: bf16[128,128], index: 15, kind: input, shape index: {}]
  %s16 = inlined_call_operand.vmem [shape: f32[1,128], index: 16, kind: input, shape index: {}]
  %s17 = inlined_call_operand.vmem [shape: bf16[16,128], index: 17, kind: output, shape index: {}]
  %s18 = sld [smem:[#allocation0]]
  $region110: #{_mlp_ae_forward.1} parent=0
    _
  %s20 = ssub.s32 1, %s18
  %s21 = scalar_select 0, %s20, %s18
  $region1: #{_mlp_ae_forward.1} parent=0
    #allocation2 [shape = 'u8[32768]{0}', space=vmem, size = 0x8000, scoped, tag = 'input window, operand 1, single buffered']
    #allocation3 [shape = 's32[1]{0}', space=sflag, size = 0x4, scoped, tag = 'scoped memory for _mlp_ae_forward.1']
    #allocation4 [shape = 'u8[32768]{0}', space=vmem, size = 0x8000, scoped, tag = 'input window, operand 3, single buffered']
    #allocation5 [shape = 's32[1]{0}', space=sflag, size = 0x4, scoped, tag = 'scoped memory for _mlp_ae_forward.1']
    #allocation6 [shape = 'u8[32768]{0}', space=vmem, size = 0x8000, scoped, tag = 'input window, operand 5, single buffered']
    #allocation7 [shape = 'u8[32768]{0}', space=vmem, size = 0x8000, scoped, tag = 'input window, operand 7, single buffered']
    #allocation8 [shape = 's32[1]{0}', space=sflag, size = 0x4, scoped, tag = 'scoped memory for _mlp_ae_forward.1']
    #allocation9 [shape = 'u8[32768]{0}', space=vmem, size = 0x8000, scoped, tag = 'input window, operand 9, single buffered']
    #allocation10 [shape = 'u8[32768]{0}', space=vmem, size = 0x8000, scoped, tag = 'input window, operand 11, single buffered']
    #allocation11 [shape = 's32[1]{0}', space=sflag, size = 0x4, scoped, tag = 'scoped memory for _mlp_ae_forward.1']
    #allocation12 [shape = 'u8[32768]{0}', space=vmem, size = 0x8000, scoped, tag = 'input window, operand 13, single buffered']
    #allocation13 [shape = 'u8[32768]{0}', space=vmem, size = 0x8000, scoped, tag = 'input window, operand 15, single buffered']
    #allocation14 [shape = 's32[1]{0}', space=sflag, size = 0x4, scoped, tag = 'scoped memory for _mlp_ae_forward.1']
    %22 = vsyncpa [#allocation3], 0
    %23 = vsyncpa [#allocation5], 0
    %24 = vsyncpa [#allocation8], 0
    %25 = vsyncpa [#allocation11], 0
    %26 = vsyncpa [#allocation14], 0
    // Predicated region
    $region2: #{_mlp_ae_forward.1} parent=1 // pred_check
      _
    $region3: #{_mlp_ae_forward.1} parent=1 // pred_check_branch
      %28 = sbr.rel (0) target = $region5
    $region4: #{_mlp_ae_forward.1} parent=1 // pred_region
      _
    $region5: #{_mlp_ae_forward.1} parent=1 // pred_fallthru
      _
    // Predicated region
    $region6: #{_mlp_ae_forward.1} parent=1 // pred_check
      _
    $region7: #{_mlp_ae_forward.1} parent=1 // pred_check_branch
      %30 = sbr.rel (0) target = $region9
    $region8: #{_mlp_ae_forward.1} parent=1 // pred_region
      %32 = vsyncadd [#allocation3], 0
      %s33 = sshll.u32 %s1, 4
      %s34 = int_to_ptr.hbm [resolvable:$true] %s33
      %s35 = sshll.u32 [#allocation2], 4
      %s36 = int_to_ptr.vmem [resolvable:$true] %s35
      %41 = dma.hbm_to_vmem [thread:$0]  %s34, 1024, %s36, [#allocation3], 64, 64, 4
    $region9: #{_mlp_ae_forward.1} parent=1 // pred_fallthru
      _
    // Predicated region
    $region10: #{_mlp_ae_forward.1} parent=1 // pred_check
      _
    $region11: #{_mlp_ae_forward.1} parent=1 // pred_check_branch
      %43 = sbr.rel (0) target = $region13
    $region12: #{_mlp_ae_forward.1} parent=1 // pred_region
      _
    $region13: #{_mlp_ae_forward.1} parent=1 // pred_fallthru
      _
    // Predicated region
    $region14: #{_mlp_ae_forward.1} parent=1 // pred_check
      _
    $region15: #{_mlp_ae_forward.1} parent=1 // pred_check_branch
      %45 = sbr.rel (0) target = $region17
    $region16: #{_mlp_ae_forward.1} parent=1 // pred_region
      %47 = vsyncadd [#allocation5], 0
      %s48 = sshll.u32 %s3, 4
      %s49 = int_to_ptr.hbm [resolvable:$true] %s48
      %s50 = sshll.u32 [#allocation4], 4
      %s51 = int_to_ptr.vmem [resolvable:$true] %s50
      %56 = dma.hbm_to_vmem [thread:$0]  %s49, 1024, %s51, [#allocation5], 64, 64, 4
    $region17: #{_mlp_ae_forward.1} parent=1 // pred_fallthru
      _
    // Predicated region
    $region18: #{_mlp_ae_forward.1} parent=1 // pred_check
      _
    $region19: #{_mlp_ae_forward.1} parent=1 // pred_check_branch
      %58 = sbr.rel (0) target = $region21
    $region20: #{_mlp_ae_forward.1} parent=1 // pred_region
      _
    $region21: #{_mlp_ae_forward.1} parent=1 // pred_fallthru
      _
    // Predicated region
    $region22: #{_mlp_ae_forward.1} parent=1 // pred_check
      _
    $region23: #{_mlp_ae_forward.1} parent=1 // pred_check_branch
      %60 = sbr.rel (0) target = $region25
    $region24: #{_mlp_ae_forward.1} parent=1 // pred_region
      %62 = vsyncadd [#allocation5], 0
      %s63 = sshll.u32 %s5, 4
      %s64 = int_to_ptr.hbm [resolvable:$true] %s63
      %s65 = sshll.u32 [#allocation6], 4
      %s66 = int_to_ptr.vmem [resolvable:$true] %s65
      %71 = dma.hbm_to_vmem [thread:$0]  %s64, 1024, %s66, [#allocation5], 64, 64, 4
    $region25: #{_mlp_ae_forward.1} parent=1 // pred_fallthru
      _
    // Predicated region
    $region26: #{_mlp_ae_forward.1} parent=1 // pred_check
      _
    $region27: #{_mlp_ae_forward.1} parent=1 // pred_check_branch
      %73 = sbr.rel (0) target = $region29
    $region28: #{_mlp_ae_forward.1} parent=1 // pred_region
      _
    $region29: #{_mlp_ae_forward.1} parent=1 // pred_fallthru
      _
    // Predicated region
    $region30: #{_mlp_ae_forward.1} parent=1 // pred_check
      _
    $region31: #{_mlp_ae_forward.1} parent=1 // pred_check_branch
      %75 = sbr.rel (0) target = $region33
    $region32: #{_mlp_ae_forward.1} parent=1 // pred_region
      %77 = vsyncadd [#allocation8], 0
      %s78 = sshll.u32 %s7, 4
      %s79 = int_to_ptr.hbm [resolvable:$true] %s78
      %s80 = sshll.u32 [#allocation7], 4
      %s81 = int_to_ptr.vmem [resolvable:$true] %s80
      %86 = dma.hbm_to_vmem [thread:$0]  %s79, 1024, %s81, [#allocation8], 64, 64, 4
    $region33: #{_mlp_ae_forward.1} parent=1 // pred_fallthru
      _
    // Predicated region
    $region34: #{_mlp_ae_forward.1} parent=1 // pred_check
      _
    $region35: #{_mlp_ae_forward.1} parent=1 // pred_check_branch
      %88 = sbr.rel (0) target = $region37
    $region36: #{_mlp_ae_forward.1} parent=1 // pred_region
      _
    $region37: #{_mlp_ae_forward.1} parent=1 // pred_fallthru
      _
    // Predicated region
    $region38: #{_mlp_ae_forward.1} parent=1 // pred_check
      _
    $region39: #{_mlp_ae_forward.1} parent=1 // pred_check_branch
      %90 = sbr.rel (0) target = $region41
    $region40: #{_mlp_ae_forward.1} parent=1 // pred_region
      %92 = vsyncadd [#allocation8], 0
      %s93 = sshll.u32 %s9, 4
      %s94 = int_to_ptr.hbm [resolvable:$true] %s93
      %s95 = sshll.u32 [#allocation9], 4
      %s96 = int_to_ptr.vmem [resolvable:$true] %s95
      %101 = dma.hbm_to_vmem [thread:$0]  %s94, 1024, %s96, [#allocation8], 64, 64, 4
    $region41: #{_mlp_ae_forward.1} parent=1 // pred_fallthru
      _
    // Predicated region
    $region42: #{_mlp_ae_forward.1} parent=1 // pred_check
      _
    $region43: #{_mlp_ae_forward.1} parent=1 // pred_check_branch
      %103 = sbr.rel (0) target = $region45
    $region44: #{_mlp_ae_forward.1} parent=1 // pred_region
      _
    $region45: #{_mlp_ae_forward.1} parent=1 // pred_fallthru
      _
    // Predicated region
    $region46: #{_mlp_ae_forward.1} parent=1 // pred_check
      _
    $region47: #{_mlp_ae_forward.1} parent=1 // pred_check_branch
      %105 = sbr.rel (0) target = $region49
    $region48: #{_mlp_ae_forward.1} parent=1 // pred_region
      %107 = vsyncadd [#allocation11], 0
      %s108 = sshll.u32 %s11, 4
      %s109 = int_to_ptr.hbm [resolvable:$true] %s108
      %s110 = sshll.u32 [#allocation10], 4
      %s111 = int_to_ptr.vmem [resolvable:$true] %s110
      %116 = dma.hbm_to_vmem [thread:$0]  %s109, 1024, %s111, [#allocation11], 64, 64, 4
    $region49: #{_mlp_ae_forward.1} parent=1 // pred_fallthru
      _
    // Predicated region
    $region50: #{_mlp_ae_forward.1} parent=1 // pred_check
      _
    $region51: #{_mlp_ae_forward.1} parent=1 // pred_check_branch
      %118 = sbr.rel (0) target = $region53
    $region52: #{_mlp_ae_forward.1} parent=1 // pred_region
      _
    $region53: #{_mlp_ae_forward.1} parent=1 // pred_fallthru
      _
    // Predicated region
    $region54: #{_mlp_ae_forward.1} parent=1 // pred_check
      _
    $region55: #{_mlp_ae_forward.1} parent=1 // pred_check_branch
      %120 = sbr.rel (0) target = $region57
    $region56: #{_mlp_ae_forward.1} parent=1 // pred_region
      %122 = vsyncadd [#allocation11], 0
      %s123 = sshll.u32 %s13, 4
      %s124 = int_to_ptr.hbm [resolvable:$true] %s123
      %s125 = sshll.u32 [#allocation12], 4
      %s126 = int_to_ptr.vmem [resolvable:$true] %s125
      %131 = dma.hbm_to_vmem [thread:$0]  %s124, 1024, %s126, [#allocation11], 64, 64, 4
    $region57: #{_mlp_ae_forward.1} parent=1 // pred_fallthru
      _
    // Predicated region
    $region58: #{_mlp_ae_forward.1} parent=1 // pred_check
      _
    $region59: #{_mlp_ae_forward.1} parent=1 // pred_check_branch
      %133 = sbr.rel (0) target = $region61
    $region60: #{_mlp_ae_forward.1} parent=1 // pred_region
      _
    $region61: #{_mlp_ae_forward.1} parent=1 // pred_fallthru
      _
    // Predicated region
    $region62: #{_mlp_ae_forward.1} parent=1 // pred_check
      _
    $region63: #{_mlp_ae_forward.1} parent=1 // pred_check_branch
      %135 = sbr.rel (0) target = $region65
    $region64: #{_mlp_ae_forward.1} parent=1 // pred_region
      %137 = vsyncadd [#allocation14], 0
      %s138 = sshll.u32 %s15, 4
      %s139 = int_to_ptr.hbm [resolvable:$true] %s138
      %s140 = sshll.u32 [#allocation13], 4
      %s141 = int_to_ptr.vmem [resolvable:$true] %s140
      %146 = dma.hbm_to_vmem [thread:$0]  %s139, 1024, %s141, [#allocation14], 64, 64, 4
    $region65: #{_mlp_ae_forward.1} parent=1 // pred_fallthru
      _
    // Predicated region
    $region66: #{_mlp_ae_forward.1} parent=1 // pred_check
      _
    $region67: #{_mlp_ae_forward.1} parent=1 // pred_check_branch
      %148 = sbr.rel (0) target = $region69
    $region68: #{_mlp_ae_forward.1} parent=1 // pred_region
      _
    $region69: #{_mlp_ae_forward.1} parent=1 // pred_fallthru
      _
    // Predicated region
    $region70: #{_mlp_ae_forward.1} parent=1 // pred_check
      _
    $region71: #{_mlp_ae_forward.1} parent=1 // pred_check_branch
      %150 = sbr.rel (0) target = $region73
    $region72: #{_mlp_ae_forward.1} parent=1 // pred_region
      %152 = dma.done [#allocation3], 1024
    $region73: #{_mlp_ae_forward.1} parent=1 // pred_fallthru
      _
    // Predicated region
    $region74: #{_mlp_ae_forward.1} parent=1 // pred_check
      _
    $region75: #{_mlp_ae_forward.1} parent=1 // pred_check_branch
      %154 = sbr.rel (0) target = $region77
    $region76: #{_mlp_ae_forward.1} parent=1 // pred_region
      %156 = dma.done [#allocation5], 1024
    $region77: #{_mlp_ae_forward.1} parent=1 // pred_fallthru
      _
    // Predicated region
    $region78: #{_mlp_ae_forward.1} parent=1 // pred_check
      _
    $region79: #{_mlp_ae_forward.1} parent=1 // pred_check_branch
      %158 = sbr.rel (0) target = $region81
    $region80: #{_mlp_ae_forward.1} parent=1 // pred_region
      %160 = dma.done [#allocation5], 1024
    $region81: #{_mlp_ae_forward.1} parent=1 // pred_fallthru
      _
    // Predicated region
    $region82: #{_mlp_ae_forward.1} parent=1 // pred_check
      _
    $region83: #{_mlp_ae_forward.1} parent=1 // pred_check_branch
      %162 = sbr.rel (0) target = $region85
    $region84: #{_mlp_ae_forward.1} parent=1 // pred_region
      %164 = dma.done [#allocation8], 1024
    $region85: #{_mlp_ae_forward.1} parent=1 // pred_fallthru
      _
    // Predicated region
    $region86: #{_mlp_ae_forward.1} parent=1 // pred_check
      _
    $region87: #{_mlp_ae_forward.1} parent=1 // pred_check_branch
      %166 = sbr.rel (0) target = $region89
    $region88: #{_mlp_ae_forward.1} parent=1 // pred_region
      %168 = dma.done [#allocation8], 1024
    $region89: #{_mlp_ae_forward.1} parent=1 // pred_fallthru
      _
    // Predicated region
    $region90: #{_mlp_ae_forward.1} parent=1 // pred_check
      _
    $region91: #{_mlp_ae_forward.1} parent=1 // pred_check_branch
      %170 = sbr.rel (0) target = $region93
    $region92: #{_mlp_ae_forward.1} parent=1 // pred_region
      %172 = dma.done [#allocation11], 1024
    $region93: #{_mlp_ae_forward.1} parent=1 // pred_fallthru
      _
    // Predicated region
    $region94: #{_mlp_ae_forward.1} parent=1 // pred_check
      _
    $region95: #{_mlp_ae_forward.1} parent=1 // pred_check_branch
      %174 = sbr.rel (0) target = $region97
    $region96: #{_mlp_ae_forward.1} parent=1 // pred_region
      %176 = dma.done [#allocation11], 1024
    $region97: #{_mlp_ae_forward.1} parent=1 // pred_fallthru
      _
    // Predicated region
    $region98: #{_mlp_ae_forward.1} parent=1 // pred_check
      _
    $region99: #{_mlp_ae_forward.1} parent=1 // pred_check_branch
      %178 = sbr.rel (0) target = $region101
    $region100: #{_mlp_ae_forward.1} parent=1 // pred_region
      %180 = dma.done [#allocation14], 1024
    $region101: #{_mlp_ae_forward.1} parent=1 // pred_fallthru
      _
    %v181 = vld [vmem:[%s0] sm:$0xf]
    %v182 = vld [vmem:[%s0 + $0x4] sm:$0xf]
    %v183 = vld [vmem:[#allocation2] sm:$0xf]
    %v184 = vld [vmem:[#allocation2 + $0x4] sm:$0xf]
    %v185 = vld [vmem:[#allocation2 + $0x8] sm:$0xf]
    %v186 = vld [vmem:[#allocation2 + $0xc] sm:$0xf]
    %v187 = vld [vmem:[#allocation2 + $0x10] sm:$0xf]
    %v188 = vld [vmem:[#allocation2 + $0x14] sm:$0xf]
    %v189 = vld [vmem:[#allocation2 + $0x18] sm:$0xf]
    %v190 = vld [vmem:[#allocation2 + $0x1c] sm:$0xf]
    %v191 = vld [vmem:[#allocation2 + $0x20] sm:$0xf]
    %v192 = vld [vmem:[#allocation2 + $0x24] sm:$0xf]
    %v193 = vld [vmem:[#allocation2 + $0x28] sm:$0xf]
    %v194 = vld [vmem:[#allocation2 + $0x2c] sm:$0xf]
    %v195 = vld [vmem:[#allocation2 + $0x30] sm:$0xf]
    %v196 = vld [vmem:[#allocation2 + $0x34] sm:$0xf]
    %v197 = vld [vmem:[#allocation2 + $0x38] sm:$0xf]
    %v198 = vld [vmem:[#allocation2 + $0x3c] sm:$0xf]
    %v199 = vld [vmem:[%s2] sm:$0x1]
    %v201 = vperm.slane %v199, 0
    %v205 = vunpack.c.l.b16 %v181
    %v206 = vunpack.c.l.b16 %v182
    %v207 = vpack.c.b16 %v206, %v205
    %v225 = vunpack.c.l.b16 %v183
    %v226 = vunpack.c.l.b16 %v184
    %v227 = vunpack.c.l.b16 %v185
    %v228 = vunpack.c.l.b16 %v186
    %v229 = vunpack.c.l.b16 %v187
    %v230 = vunpack.c.l.b16 %v188
    %v231 = vunpack.c.l.b16 %v189
    %v232 = vunpack.c.l.b16 %v190
    %v233 = vunpack.c.l.b16 %v191
    %v234 = vunpack.c.l.b16 %v192
    %v235 = vunpack.c.l.b16 %v193
    %v236 = vunpack.c.l.b16 %v194
    %v237 = vunpack.c.l.b16 %v195
    %v238 = vunpack.c.l.b16 %v196
    %v239 = vunpack.c.l.b16 %v197
    %v240 = vunpack.c.l.b16 %v198
    %v241 = vpack.c.b16 %v226, %v225
    %v242 = vpack.c.b16 %v228, %v227
    %v243 = vpack.c.b16 %v230, %v229
    %v244 = vpack.c.b16 %v232, %v231
    %v245 = vpack.c.b16 %v234, %v233
    %v246 = vpack.c.b16 %v236, %v235
    %v247 = vpack.c.b16 %v238, %v237
    %v248 = vpack.c.b16 %v240, %v239
    %257 = vmatpush.bf16.msra.mxu0 %v248
    %258 = vmatpush.bf16.msra.mxu0 %v247
    %259 = vmatpush.bf16.msra.mxu0 %v246
    %260 = vmatpush.bf16.msra.mxu0 %v245
    %261 = vmatpush.bf16.msra.mxu0 %v244
    %262 = vmatpush.bf16.msra.mxu0 %v243
    %263 = vmatpush.bf16.msra.mxu0 %v242
    %264 = vmatpush.bf16.msra.mxu0 %v241
    %265 = vmatmul.bf16.gmra.mxu0 %v207
    %v266 = vpop.f32.mrf.mxu0
    %v267 = vadd.f32 %v201, %v266
    %v268 = vpop.f32.mrf.mxu0
    %v269 = vadd.f32 %v201, %v268
    %270 = vdwg.mxu0
    %v271 = vmax.f32 %v267, 0.0
    %v272 = vmax.f32 %v269, 0.0
    %v273 = vpack.c.bf16 %v272, %v271
    %v274 = vld [vmem:[#allocation4] sm:$0xf]
    %v275 = vld [vmem:[#allocation4 + $0x4] sm:$0xf]
    %v276 = vld [vmem:[#allocation4 + $0x8] sm:$0xf]
    %v277 = vld [vmem:[#allocation4 + $0xc] sm:$0xf]
    %v278 = vld [vmem:[#allocation4 + $0x10] sm:$0xf]
    %v279 = vld [vmem:[#allocation4 + $0x14] sm:$0xf]
    %v280 = vld [vmem:[#allocation4 + $0x18] sm:$0xf]
    %v281 = vld [vmem:[#allocation4 + $0x1c] sm:$0xf]
    %v282 = vld [vmem:[#allocation4 + $0x20] sm:$0xf]
    %v283 = vld [vmem:[#allocation4 + $0x24] sm:$0xf]
    %v284 = vld [vmem:[#allocation4 + $0x28] sm:$0xf]
    %v285 = vld [vmem:[#allocation4 + $0x2c] sm:$0xf]
    %v286 = vld [vmem:[#allocation4 + $0x30] sm:$0xf]
    %v287 = vld [vmem:[#allocation4 + $0x34] sm:$0xf]
    %v288 = vld [vmem:[#allocation4 + $0x38] sm:$0xf]
    %v289 = vld [vmem:[#allocation4 + $0x3c] sm:$0xf]
    %v290 = vld [vmem:[%s4] sm:$0x1]
    %v292 = vperm.slane %v290, 0
    %v310 = vunpack.c.l.b16 %v274
    %v311 = vunpack.c.l.b16 %v275
    %v312 = vunpack.c.l.b16 %v276
    %v313 = vunpack.c.l.b16 %v277
    %v314 = vunpack.c.l.b16 %v278
    %v315 = vunpack.c.l.b16 %v279
    %v316 = vunpack.c.l.b16 %v280
    %v317 = vunpack.c.l.b16 %v281
    %v318 = vunpack.c.l.b16 %v282
    %v319 = vunpack.c.l.b16 %v283
    %v320 = vunpack.c.l.b16 %v284
    %v321 = vunpack.c.l.b16 %v285
    %v322 = vunpack.c.l.b16 %v286
    %v323 = vunpack.c.l.b16 %v287
    %v324 = vunpack.c.l.b16 %v288
    %v325 = vunpack.c.l.b16 %v289
    %v326 = vpack.c.b16 %v311, %v310
    %v327 = vpack.c.b16 %v313, %v312
    %v328 = vpack.c.b16 %v315, %v314
    %v329 = vpack.c.b16 %v317, %v316
    %v330 = vpack.c.b16 %v319, %v318
    %v331 = vpack.c.b16 %v321, %v320
    %v332 = vpack.c.b16 %v323, %v322
    %v333 = vpack.c.b16 %v325, %v324
    %342 = vmatpush.bf16.msra.mxu0 %v333
    %343 = vmatpush.bf16.msra.mxu0 %v332
    %344 = vmatpush.bf16.msra.mxu0 %v331
    %345 = vmatpush.bf16.msra.mxu0 %v330
    %346 = vmatpush.bf16.msra.mxu0 %v329
    %347 = vmatpush.bf16.msra.mxu0 %v328
    %348 = vmatpush.bf16.msra.mxu0 %v327
    %349 = vmatpush.bf16.msra.mxu0 %v326
    %350 = vmatmul.bf16.gmra.mxu0 %v273
    %v351 = vpop.f32.mrf.mxu0
    %v352 = vadd.f32 %v292, %v351
    %v353 = vpop.f32.mrf.mxu0
    %v354 = vadd.f32 %v292, %v353
    %355 = vdwg.mxu0
    %v356 = vmax.f32 %v352, 0.0
    %v357 = vmax.f32 %v354, 0.0
    %v358 = vpack.c.bf16 %v357, %v356
    %v359 = vld [vmem:[#allocation6] sm:$0xf]
    %v360 = vld [vmem:[#allocation6 + $0x4] sm:$0xf]
    %v361 = vld [vmem:[#allocation6 + $0x8] sm:$0xf]
    %v362 = vld [vmem:[#allocation6 + $0xc] sm:$0xf]
    %v363 = vld [vmem:[#allocation6 + $0x10] sm:$0xf]
    %v364 = vld [vmem:[#allocation6 + $0x14] sm:$0xf]
    %v365 = vld [vmem:[#allocation6 + $0x18] sm:$0xf]
    %v366 = vld [vmem:[#allocation6 + $0x1c] sm:$0xf]
    %v367 = vld [vmem:[#allocation6 + $0x20] sm:$0xf]
    %v368 = vld [vmem:[#allocation6 + $0x24] sm:$0xf]
    %v369 = vld [vmem:[#allocation6 + $0x28] sm:$0xf]
    %v370 = vld [vmem:[#allocation6 + $0x2c] sm:$0xf]
    %v371 = vld [vmem:[#allocation6 + $0x30] sm:$0xf]
    %v372 = vld [vmem:[#allocation6 + $0x34] sm:$0xf]
    %v373 = vld [vmem:[#allocation6 + $0x38] sm:$0xf]
    %v374 = vld [vmem:[#allocation6 + $0x3c] sm:$0xf]
    %v375 = vld [vmem:[%s6] sm:$0x1]
    %v377 = vperm.slane %v375, 0
    %v395 = vunpack.c.l.b16 %v359
    %v396 = vunpack.c.l.b16 %v360
    %v397 = vunpack.c.l.b16 %v361
    %v398 = vunpack.c.l.b16 %v362
    %v399 = vunpack.c.l.b16 %v363
    %v400 = vunpack.c.l.b16 %v364
    %v401 = vunpack.c.l.b16 %v365
    %v402 = vunpack.c.l.b16 %v366
    %v403 = vunpack.c.l.b16 %v367
    %v404 = vunpack.c.l.b16 %v368
    %v405 = vunpack.c.l.b16 %v369
    %v406 = vunpack.c.l.b16 %v370
    %v407 = vunpack.c.l.b16 %v371
    %v408 = vunpack.c.l.b16 %v372
    %v409 = vunpack.c.l.b16 %v373
    %v410 = vunpack.c.l.b16 %v374
    %v411 = vpack.c.b16 %v396, %v395
    %v412 = vpack.c.b16 %v398, %v397
    %v413 = vpack.c.b16 %v400, %v399
    %v414 = vpack.c.b16 %v402, %v401
    %v415 = vpack.c.b16 %v404, %v403
    %v416 = vpack.c.b16 %v406, %v405
    %v417 = vpack.c.b16 %v408, %v407
    %v418 = vpack.c.b16 %v410, %v409
    %427 = vmatpush.bf16.msra.mxu0 %v418
    %428 = vmatpush.bf16.msra.mxu0 %v417
    %429 = vmatpush.bf16.msra.mxu0 %v416
    %430 = vmatpush.bf16.msra.mxu0 %v415
    %431 = vmatpush.bf16.msra.mxu0 %v414
    %432 = vmatpush.bf16.msra.mxu0 %v413
    %433 = vmatpush.bf16.msra.mxu0 %v412
    %434 = vmatpush.bf16.msra.mxu0 %v411
    %435 = vmatmul.bf16.gmra.mxu0 %v358
    %v436 = vpop.f32.mrf.mxu0
    %v437 = vadd.f32 %v377, %v436
    %v438 = vpop.f32.mrf.mxu0
    %v439 = vadd.f32 %v377, %v438
    %440 = vdwg.mxu0
    %v441 = vmax.f32 %v437, 0.0
    %v442 = vmax.f32 %v439, 0.0
    %v443 = vpack.c.bf16 %v442, %v441
    %v444 = vld [vmem:[#allocation7] sm:$0xf]
    %v445 = vld [vmem:[#allocation7 + $0x4] sm:$0xf]
    %v446 = vld [vmem:[#allocation7 + $0x8] sm:$0xf]
    %v447 = vld [vmem:[#allocation7 + $0xc] sm:$0xf]
    %v448 = vld [vmem:[#allocation7 + $0x10] sm:$0xf]
    %v449 = vld [vmem:[#allocation7 + $0x14] sm:$0xf]
    %v450 = vld [vmem:[#allocation7 + $0x18] sm:$0xf]
    %v451 = vld [vmem:[#allocation7 + $0x1c] sm:$0xf]
    %v452 = vld [vmem:[#allocation7 + $0x20] sm:$0xf]
    %v453 = vld [vmem:[#allocation7 + $0x24] sm:$0xf]
    %v454 = vld [vmem:[#allocation7 + $0x28] sm:$0xf]
    %v455 = vld [vmem:[#allocation7 + $0x2c] sm:$0xf]
    %v456 = vld [vmem:[#allocation7 + $0x30] sm:$0xf]
    %v457 = vld [vmem:[#allocation7 + $0x34] sm:$0xf]
    %v458 = vld [vmem:[#allocation7 + $0x38] sm:$0xf]
    %v459 = vld [vmem:[#allocation7 + $0x3c] sm:$0xf]
    %v460 = vld [vmem:[%s8] sm:$0x1]
    %v462 = vperm.slane %v460, 0
    %v480 = vunpack.c.l.b16 %v444
    %v481 = vunpack.c.l.b16 %v445
    %v482 = vunpack.c.l.b16 %v446
    %v483 = vunpack.c.l.b16 %v447
    %v484 = vunpack.c.l.b16 %v448
    %v485 = vunpack.c.l.b16 %v449
    %v486 = vunpack.c.l.b16 %v450
    %v487 = vunpack.c.l.b16 %v451
    %v488 = vunpack.c.l.b16 %v452
    %v489 = vunpack.c.l.b16 %v453
    %v490 = vunpack.c.l.b16 %v454
    %v491 = vunpack.c.l.b16 %v455
    %v492 = vunpack.c.l.b16 %v456
    %v493 = vunpack.c.l.b16 %v457
    %v494 = vunpack.c.l.b16 %v458
    %v495 = vunpack.c.l.b16 %v459
    %v496 = vpack.c.b16 %v481, %v480
    %v497 = vpack.c.b16 %v483, %v482
    %v498 = vpack.c.b16 %v485, %v484
    %v499 = vpack.c.b16 %v487, %v486
    %v500 = vpack.c.b16 %v489, %v488
    %v501 = vpack.c.b16 %v491, %v490
    %v502 = vpack.c.b16 %v493, %v492
    %v503 = vpack.c.b16 %v495, %v494
    %512 = vmatpush.bf16.msra.mxu0 %v503
    %513 = vmatpush.bf16.msra.mxu0 %v502
    %514 = vmatpush.bf16.msra.mxu0 %v501
    %515 = vmatpush.bf16.msra.mxu0 %v500
    %516 = vmatpush.bf16.msra.mxu0 %v499
    %517 = vmatpush.bf16.msra.mxu0 %v498
    %518 = vmatpush.bf16.msra.mxu0 %v497
    %519 = vmatpush.bf16.msra.mxu0 %v496
    %520 = vmatmul.bf16.gmra.mxu0 %v443
    %v521 = vpop.f32.mrf.mxu0
    %v522 = vadd.f32 %v462, %v521
    %v523 = vpop.f32.mrf.mxu0
    %v524 = vadd.f32 %v462, %v523
    %525 = vdwg.mxu0
    %v526 = vpack.c.bf16 %v524, %v522
    %v527 = vld [vmem:[#allocation9] sm:$0xf]
    %v528 = vld [vmem:[#allocation9 + $0x4] sm:$0xf]
    %v529 = vld [vmem:[#allocation9 + $0x8] sm:$0xf]
    %v530 = vld [vmem:[#allocation9 + $0xc] sm:$0xf]
    %v531 = vld [vmem:[#allocation9 + $0x10] sm:$0xf]
    %v532 = vld [vmem:[#allocation9 + $0x14] sm:$0xf]
    %v533 = vld [vmem:[#allocation9 + $0x18] sm:$0xf]
    %v534 = vld [vmem:[#allocation9 + $0x1c] sm:$0xf]
    %v535 = vld [vmem:[#allocation9 + $0x20] sm:$0xf]
    %v536 = vld [vmem:[#allocation9 + $0x24] sm:$0xf]
    %v537 = vld [vmem:[#allocation9 + $0x28] sm:$0xf]
    %v538 = vld [vmem:[#allocation9 + $0x2c] sm:$0xf]
    %v539 = vld [vmem:[#allocation9 + $0x30] sm:$0xf]
    %v540 = vld [vmem:[#allocation9 + $0x34] sm:$0xf]
    %v541 = vld [vmem:[#allocation9 + $0x38] sm:$0xf]
    %v542 = vld [vmem:[#allocation9 + $0x3c] sm:$0xf]
    %v543 = vld [vmem:[%s10] sm:$0x1]
    %v545 = vperm.slane %v543, 0
    %v563 = vunpack.c.l.b16 %v527
    %v564 = vunpack.c.l.b16 %v528
    %v565 = vunpack.c.l.b16 %v529
    %v566 = vunpack.c.l.b16 %v530
    %v567 = vunpack.c.l.b16 %v531
    %v568 = vunpack.c.l.b16 %v532
    %v569 = vunpack.c.l.b16 %v533
    %v570 = vunpack.c.l.b16 %v534
    %v571 = vunpack.c.l.b16 %v535
    %v572 = vunpack.c.l.b16 %v536
    %v573 = vunpack.c.l.b16 %v537
    %v574 = vunpack.c.l.b16 %v538
    %v575 = vunpack.c.l.b16 %v539
    %v576 = vunpack.c.l.b16 %v540
    %v577 = vunpack.c.l.b16 %v541
    %v578 = vunpack.c.l.b16 %v542
    %v579 = vpack.c.b16 %v564, %v563
    %v580 = vpack.c.b16 %v566, %v565
    %v581 = vpack.c.b16 %v568, %v567
    %v582 = vpack.c.b16 %v570, %v569
    %v583 = vpack.c.b16 %v572, %v571
    %v584 = vpack.c.b16 %v574, %v573
    %v585 = vpack.c.b16 %v576, %v575
    %v586 = vpack.c.b16 %v578, %v577
    %595 = vmatpush.bf16.msra.mxu0 %v586
    %596 = vmatpush.bf16.msra.mxu0 %v585
    %597 = vmatpush.bf16.msra.mxu0 %v584
    %598 = vmatpush.bf16.msra.mxu0 %v583
    %599 = vmatpush.bf16.msra.mxu0 %v582
    %600 = vmatpush.bf16.msra.mxu0 %v581
    %601 = vmatpush.bf16.msra.mxu0 %v580
    %602 = vmatpush.bf16.msra.mxu0 %v579
    %603 = vmatmul.bf16.gmra.mxu0 %v526
    %v604 = vpop.f32.mrf.mxu0
    %v605 = vadd.f32 %v545, %v604
    %v606 = vpop.f32.mrf.mxu0
    %v607 = vadd.f32 %v545, %v606
    %608 = vdwg.mxu0
    %v609 = vmax.f32 %v605, 0.0
    %v610 = vmax.f32 %v607, 0.0
    %v611 = vpack.c.bf16 %v610, %v609
    %v612 = vld [vmem:[#allocation10] sm:$0xf]
    %v613 = vld [vmem:[#allocation10 + $0x4] sm:$0xf]
    %v614 = vld [vmem:[#allocation10 + $0x8] sm:$0xf]
    %v615 = vld [vmem:[#allocation10 + $0xc] sm:$0xf]
    %v616 = vld [vmem:[#allocation10 + $0x10] sm:$0xf]
    %v617 = vld [vmem:[#allocation10 + $0x14] sm:$0xf]
    %v618 = vld [vmem:[#allocation10 + $0x18] sm:$0xf]
    %v619 = vld [vmem:[#allocation10 + $0x1c] sm:$0xf]
    %v620 = vld [vmem:[#allocation10 + $0x20] sm:$0xf]
    %v621 = vld [vmem:[#allocation10 + $0x24] sm:$0xf]
    %v622 = vld [vmem:[#allocation10 + $0x28] sm:$0xf]
    %v623 = vld [vmem:[#allocation10 + $0x2c] sm:$0xf]
    %v624 = vld [vmem:[#allocation10 + $0x30] sm:$0xf]
    %v625 = vld [vmem:[#allocation10 + $0x34] sm:$0xf]
    %v626 = vld [vmem:[#allocation10 + $0x38] sm:$0xf]
    %v627 = vld [vmem:[#allocation10 + $0x3c] sm:$0xf]
    %v628 = vld [vmem:[%s12] sm:$0x1]
    %v630 = vperm.slane %v628, 0
    %v648 = vunpack.c.l.b16 %v612
    %v649 = vunpack.c.l.b16 %v613
    %v650 = vunpack.c.l.b16 %v614
    %v651 = vunpack.c.l.b16 %v615
    %v652 = vunpack.c.l.b16 %v616
    %v653 = vunpack.c.l.b16 %v617
    %v654 = vunpack.c.l.b16 %v618
    %v655 = vunpack.c.l.b16 %v619
    %v656 = vunpack.c.l.b16 %v620
    %v657 = vunpack.c.l.b16 %v621
    %v658 = vunpack.c.l.b16 %v622
    %v659 = vunpack.c.l.b16 %v623
    %v660 = vunpack.c.l.b16 %v624
    %v661 = vunpack.c.l.b16 %v625
    %v662 = vunpack.c.l.b16 %v626
    %v663 = vunpack.c.l.b16 %v627
    %v664 = vpack.c.b16 %v649, %v648
    %v665 = vpack.c.b16 %v651, %v650
    %v666 = vpack.c.b16 %v653, %v652
    %v667 = vpack.c.b16 %v655, %v654
    %v668 = vpack.c.b16 %v657, %v656
    %v669 = vpack.c.b16 %v659, %v658
    %v670 = vpack.c.b16 %v661, %v660
    %v671 = vpack.c.b16 %v663, %v662
    %680 = vmatpush.bf16.msra.mxu0 %v671
    %681 = vmatpush.bf16.msra.mxu0 %v670
    %682 = vmatpush.bf16.msra.mxu0 %v669
    %683 = vmatpush.bf16.msra.mxu0 %v668
    %684 = vmatpush.bf16.msra.mxu0 %v667
    %685 = vmatpush.bf16.msra.mxu0 %v666
    %686 = vmatpush.bf16.msra.mxu0 %v665
    %687 = vmatpush.bf16.msra.mxu0 %v664
    %688 = vmatmul.bf16.gmra.mxu0 %v611
    %v689 = vpop.f32.mrf.mxu0
    %v690 = vadd.f32 %v630, %v689
    %v691 = vpop.f32.mrf.mxu0
    %v692 = vadd.f32 %v630, %v691
    %693 = vdwg.mxu0
    %v694 = vmax.f32 %v690, 0.0
    %v695 = vmax.f32 %v692, 0.0
    %v696 = vpack.c.bf16 %v695, %v694
    %v697 = vld [vmem:[#allocation12] sm:$0xf]
    %v698 = vld [vmem:[#allocation12 + $0x4] sm:$0xf]
    %v699 = vld [vmem:[#allocation12 + $0x8] sm:$0xf]
    %v700 = vld [vmem:[#allocation12 + $0xc] sm:$0xf]
    %v701 = vld [vmem:[#allocation12 + $0x10] sm:$0xf]
    %v702 = vld [vmem:[#allocation12 + $0x14] sm:$0xf]
    %v703 = vld [vmem:[#allocation12 + $0x18] sm:$0xf]
    %v704 = vld [vmem:[#allocation12 + $0x1c] sm:$0xf]
    %v705 = vld [vmem:[#allocation12 + $0x20] sm:$0xf]
    %v706 = vld [vmem:[#allocation12 + $0x24] sm:$0xf]
    %v707 = vld [vmem:[#allocation12 + $0x28] sm:$0xf]
    %v708 = vld [vmem:[#allocation12 + $0x2c] sm:$0xf]
    %v709 = vld [vmem:[#allocation12 + $0x30] sm:$0xf]
    %v710 = vld [vmem:[#allocation12 + $0x34] sm:$0xf]
    %v711 = vld [vmem:[#allocation12 + $0x38] sm:$0xf]
    %v712 = vld [vmem:[#allocation12 + $0x3c] sm:$0xf]
    %v713 = vld [vmem:[%s14] sm:$0x1]
    %v715 = vperm.slane %v713, 0
    %v733 = vunpack.c.l.b16 %v697
    %v734 = vunpack.c.l.b16 %v698
    %v735 = vunpack.c.l.b16 %v699
    %v736 = vunpack.c.l.b16 %v700
    %v737 = vunpack.c.l.b16 %v701
    %v738 = vunpack.c.l.b16 %v702
    %v739 = vunpack.c.l.b16 %v703
    %v740 = vunpack.c.l.b16 %v704
    %v741 = vunpack.c.l.b16 %v705
    %v742 = vunpack.c.l.b16 %v706
    %v743 = vunpack.c.l.b16 %v707
    %v744 = vunpack.c.l.b16 %v708
    %v745 = vunpack.c.l.b16 %v709
    %v746 = vunpack.c.l.b16 %v710
    %v747 = vunpack.c.l.b16 %v711
    %v748 = vunpack.c.l.b16 %v712
    %v749 = vpack.c.b16 %v734, %v733
    %v750 = vpack.c.b16 %v736, %v735
    %v751 = vpack.c.b16 %v738, %v737
    %v752 = vpack.c.b16 %v740, %v739
    %v753 = vpack.c.b16 %v742, %v741
    %v754 = vpack.c.b16 %v744, %v743
    %v755 = vpack.c.b16 %v746, %v745
    %v756 = vpack.c.b16 %v748, %v747
    %765 = vmatpush.bf16.msra.mxu0 %v756
    %766 = vmatpush.bf16.msra.mxu0 %v755
    %767 = vmatpush.bf16.msra.mxu0 %v754
    %768 = vmatpush.bf16.msra.mxu0 %v753
    %769 = vmatpush.bf16.msra.mxu0 %v752
    %770 = vmatpush.bf16.msra.mxu0 %v751
    %771 = vmatpush.bf16.msra.mxu0 %v750
    %772 = vmatpush.bf16.msra.mxu0 %v749
    %773 = vmatmul.bf16.gmra.mxu0 %v696
    %v774 = vpop.f32.mrf.mxu0
    %v775 = vadd.f32 %v715, %v774
    %v776 = vpop.f32.mrf.mxu0
    %v777 = vadd.f32 %v715, %v776
    %778 = vdwg.mxu0
    %v779 = vmax.f32 %v775, 0.0
    %v780 = vmax.f32 %v777, 0.0
    %v781 = vpack.c.bf16 %v780, %v779
    %v782 = vld [vmem:[#allocation13] sm:$0xf]
    %v783 = vld [vmem:[#allocation13 + $0x4] sm:$0xf]
    %v784 = vld [vmem:[#allocation13 + $0x8] sm:$0xf]
    %v785 = vld [vmem:[#allocation13 + $0xc] sm:$0xf]
    %v786 = vld [vmem:[#allocation13 + $0x10] sm:$0xf]
    %v787 = vld [vmem:[#allocation13 + $0x14] sm:$0xf]
    %v788 = vld [vmem:[#allocation13 + $0x18] sm:$0xf]
    %v789 = vld [vmem:[#allocation13 + $0x1c] sm:$0xf]
    %v790 = vld [vmem:[#allocation13 + $0x20] sm:$0xf]
    %v791 = vld [vmem:[#allocation13 + $0x24] sm:$0xf]
    %v792 = vld [vmem:[#allocation13 + $0x28] sm:$0xf]
    %v793 = vld [vmem:[#allocation13 + $0x2c] sm:$0xf]
    %v794 = vld [vmem:[#allocation13 + $0x30] sm:$0xf]
    %v795 = vld [vmem:[#allocation13 + $0x34] sm:$0xf]
    %v796 = vld [vmem:[#allocation13 + $0x38] sm:$0xf]
    %v797 = vld [vmem:[#allocation13 + $0x3c] sm:$0xf]
    %v798 = vld [vmem:[%s16] sm:$0x1]
    %v800 = vperm.slane %v798, 0
    %v818 = vunpack.c.l.b16 %v782
    %v819 = vunpack.c.l.b16 %v783
    %v820 = vunpack.c.l.b16 %v784
    %v821 = vunpack.c.l.b16 %v785
    %v822 = vunpack.c.l.b16 %v786
    %v823 = vunpack.c.l.b16 %v787
    %v824 = vunpack.c.l.b16 %v788
    %v825 = vunpack.c.l.b16 %v789
    %v826 = vunpack.c.l.b16 %v790
    %v827 = vunpack.c.l.b16 %v791
    %v828 = vunpack.c.l.b16 %v792
    %v829 = vunpack.c.l.b16 %v793
    %v830 = vunpack.c.l.b16 %v794
    %v831 = vunpack.c.l.b16 %v795
    %v832 = vunpack.c.l.b16 %v796
    %v833 = vunpack.c.l.b16 %v797
    %v834 = vpack.c.b16 %v819, %v818
    %v835 = vpack.c.b16 %v821, %v820
    %v836 = vpack.c.b16 %v823, %v822
    %v837 = vpack.c.b16 %v825, %v824
    %v838 = vpack.c.b16 %v827, %v826
    %v839 = vpack.c.b16 %v829, %v828
    %v840 = vpack.c.b16 %v831, %v830
    %v841 = vpack.c.b16 %v833, %v832
    %850 = vmatpush.bf16.msra.mxu0 %v841
    %851 = vmatpush.bf16.msra.mxu0 %v840
    %852 = vmatpush.bf16.msra.mxu0 %v839
    %853 = vmatpush.bf16.msra.mxu0 %v838
    %854 = vmatpush.bf16.msra.mxu0 %v837
    %855 = vmatpush.bf16.msra.mxu0 %v836
    %856 = vmatpush.bf16.msra.mxu0 %v835
    %857 = vmatpush.bf16.msra.mxu0 %v834
    %858 = vmatmul.bf16.gmra.mxu0 %v781
    %v859 = vpop.f32.mrf.mxu0
    %v860 = vadd.f32 %v800, %v859
    %v861 = vpop.f32.mrf.mxu0
    %v862 = vadd.f32 %v800, %v861
    %863 = vdwg.mxu0
    %v864 = vsub.f32 0.0, %v860
    %v865 = vsub.f32 0.0, %v862
    %v866 = vmul.f32 %v864, 1.442695
    %v867 = vpow.pop %v866
    %v868 = vmul.f32 %v865, 1.442695
    %v869 = vpow.pop %v868
    %v870 = vadd.f32 %v867, 1.0
    %v871 = vadd.f32 %v869, 1.0
    %v872 = vrcp.pop %v870
    %v873 = vmul.f32 %v870, %v872
    %v874 = vsub.f32 1.0, %v873
    %v875 = vmul.f32 %v872, %v874
    %v876 = vadd.f32 %v872, %v875
    %vm877 = vweird.f32 %v870
    %vm878 = vweird.f32 %v872
    %vm879 = vmor %vm877, %vm878
    %v880 = vsel %vm879, %v872, %v876
    %v881 = vand.u32 2147483647, %v870
    %vm882 = vcmp.eq.f32.partialorder %v881, 8.507059e+37
    %v883 = vand.u32 %v870, 2147483648
    %v884 = vor.u32 1.1754944e-38, %v883
    %v885 = vsel %vm882, %v884, %v880
    %v886 = vrcp.pop %v871
    %v887 = vmul.f32 %v871, %v886
    %v888 = vsub.f32 1.0, %v887
    %v889 = vmul.f32 %v886, %v888
    %v890 = vadd.f32 %v886, %v889
    %vm891 = vweird.f32 %v871
    %vm892 = vweird.f32 %v886
    %vm893 = vmor %vm891, %vm892
    %v894 = vsel %vm893, %v886, %v890
    %v895 = vand.u32 2147483647, %v871
    %vm896 = vcmp.eq.f32.partialorder %v895, 8.507059e+37
    %v897 = vand.u32 %v871, 2147483648
    %v898 = vor.u32 1.1754944e-38, %v897
    %v899 = vsel %vm896, %v898, %v894
    %v900 = vpack.c.bf16 %v885, %v885
    %v901 = vpack.c.bf16 %v899, %v899
    %902 = vst [vmem:[%s17] sm:$0xf] %v900
    %903 = vst [vmem:[%s17 + $0x4] sm:$0xf] %v901
    // Predicated region
    $region102: #{_mlp_ae_forward.1} parent=1 // pred_check
      _
    $region103: #{_mlp_ae_forward.1} parent=1 // pred_check_branch
      %905 = sbr.rel (0) target = $region105
    $region104: #{_mlp_ae_forward.1} parent=1 // pred_region
      _
    $region105: #{_mlp_ae_forward.1} parent=1 // pred_fallthru
      _
    // Predicated region
    $region106: #{_mlp_ae_forward.1} parent=1 // pred_check
      _
    $region107: #{_mlp_ae_forward.1} parent=1 // pred_check_branch
      %907 = sbr.rel (0) target = $region109
    $region108: #{_mlp_ae_forward.1} parent=1 // pred_region
      _
    $region109: #{_mlp_ae_forward.1} parent=1 // pred_fallthru
      _
    %908 = vsyncpa [#allocation3], 1
    %909 = vsyncpa [#allocation5], 1
    %910 = vsyncpa [#allocation8], 1
    %911 = vsyncpa [#allocation11], 1
    %912 = vsyncpa [#allocation14], 1

// kernel: _mlp_ae_forward.1
$region0: #{_mlp_ae_forward.1}
  #allocation0 [shape = 'u32[]', space=smem, size = 0x4, offset = 0x4, fixed_abs, tag = 'smem constant byte address 0x4 - core index']
  #allocation1 [shape = 'u32[72,128]{1,0:T(1,128)}', space=vmem, size = 0x9000, scoped, tag = 'internal scratch']
  %s0 = inlined_call_operand.vmem [shape: bf16[16,128], index: 0, kind: input, shape index: {}]
  %s1 = inlined_call_operand.hbm [shape: bf16[128,128], index: 1, kind: input, shape index: {}]
  %s2 = inlined_call_operand.vmem [shape: f32[1,128], index: 2, kind: input, shape index: {}]
  %s3 = inlined_call_operand.hbm [shape: bf16[128,128], index: 3, kind: input, shape index: {}]
  %s4 = inlined_call_operand.vmem [shape: f32[1,128], index: 4, kind: input, shape index: {}]
  %s5 = inlined_call_operand.hbm [shape: bf16[128,128], index: 5, kind: input, shape index: {}]
  %s6 = inlined_call_operand.vmem [shape: f32[1,128], index: 6, kind: input, shape index: {}]
  %s7 = inlined_call_operand.hbm [shape: bf16[128,128], index: 7, kind: input, shape index: {}]
  %s8 = inlined_call_operand.vmem [shape: f32[1,128], index: 8, kind: input, shape index: {}]
  %s9 = inlined_call_operand.hbm [shape: bf16[128,128], index: 9, kind: input, shape index: {}]
  %s10 = inlined_call_operand.vmem [shape: f32[1,128], index: 10, kind: input, shape index: {}]
  %s11 = inlined_call_operand.hbm [shape: bf16[128,128], index: 11, kind: input, shape index: {}]
  %s12 = inlined_call_operand.vmem [shape: f32[1,128], index: 12, kind: input, shape index: {}]
  %s13 = inlined_call_operand.hbm [shape: bf16[128,128], index: 13, kind: input, shape index: {}]
  %s14 = inlined_call_operand.vmem [shape: f32[1,128], index: 14, kind: input, shape index: {}]
  %s15 = inlined_call_operand.hbm [shape: bf16[128,128], index: 15, kind: input, shape index: {}]
  %s16 = inlined_call_operand.vmem [shape: f32[1,128], index: 16, kind: input, shape index: {}]
  %s17 = inlined_call_operand.vmem [shape: bf16[16,128], index: 17, kind: output, shape index: {}]
  %s18 = sld [smem:[#allocation0]]
  $region110: #{_mlp_ae_forward.1} parent=0
    _
  %s20 = ssub.s32 1, %s18
  %s21 = scalar_select 0, %s20, %s18
  $region1: #{_mlp_ae_forward.1} parent=0
    #allocation2 [shape = 'u8[32768]{0}', space=vmem, size = 0x8000, scoped, tag = 'input window, operand 1, single buffered']
    #allocation3 [shape = 's32[1]{0}', space=sflag, size = 0x4, scoped, tag = 'scoped memory for _mlp_ae_forward.1']
    #allocation4 [shape = 'u8[32768]{0}', space=vmem, size = 0x8000, scoped, tag = 'input window, operand 3, single buffered']
    #allocation5 [shape = 's32[1]{0}', space=sflag, size = 0x4, scoped, tag = 'scoped memory for _mlp_ae_forward.1']
    #allocation6 [shape = 'u8[32768]{0}', space=vmem, size = 0x8000, scoped, tag = 'input window, operand 5, single buffered']
    #allocation7 [shape = 'u8[32768]{0}', space=vmem, size = 0x8000, scoped, tag = 'input window, operand 7, single buffered']
    #allocation8 [shape = 's32[1]{0}', space=sflag, size = 0x4, scoped, tag = 'scoped memory for _mlp_ae_forward.1']
    #allocation9 [shape = 'u8[32768]{0}', space=vmem, size = 0x8000, scoped, tag = 'input window, operand 9, single buffered']
    #allocation10 [shape = 'u8[32768]{0}', space=vmem, size = 0x8000, scoped, tag = 'input window, operand 11, single buffered']
    #allocation11 [shape = 's32[1]{0}', space=sflag, size = 0x4, scoped, tag = 'scoped memory for _mlp_ae_forward.1']
    #allocation12 [shape = 'u8[32768]{0}', space=vmem, size = 0x8000, scoped, tag = 'input window, operand 13, single buffered']
    #allocation13 [shape = 'u8[32768]{0}', space=vmem, size = 0x8000, scoped, tag = 'input window, operand 15, single buffered']
    #allocation14 [shape = 's32[1]{0}', space=sflag, size = 0x4, scoped, tag = 'scoped memory for _mlp_ae_forward.1']
    %22 = vsyncpa [#allocation3], 0
    %23 = vsyncpa [#allocation5], 0
    %24 = vsyncpa [#allocation8], 0
    %25 = vsyncpa [#allocation11], 0
    %26 = vsyncpa [#allocation14], 0
    // Predicated region
    $region2: #{_mlp_ae_forward.1} parent=1 // pred_check
      _
    $region3: #{_mlp_ae_forward.1} parent=1 // pred_check_branch
      %28 = sbr.rel (0) target = $region5
    $region4: #{_mlp_ae_forward.1} parent=1 // pred_region
      _
    $region5: #{_mlp_ae_forward.1} parent=1 // pred_fallthru
      _
    // Predicated region
    $region6: #{_mlp_ae_forward.1} parent=1 // pred_check
      _
    $region7: #{_mlp_ae_forward.1} parent=1 // pred_check_branch
      %30 = sbr.rel (0) target = $region9
    $region8: #{_mlp_ae_forward.1} parent=1 // pred_region
      %32 = vsyncadd [#allocation3], 0
      %s33 = sshll.u32 %s1, 4
      %s34 = int_to_ptr.hbm [resolvable:$true] %s33
      %s35 = sshll.u32 [#allocation2], 4
      %s36 = int_to_ptr.vmem [resolvable:$true] %s35
      %41 = dma.hbm_to_vmem [thread:$0]  %s34, 1024, %s36, [#allocation3], 64, 64, 4
    $region9: #{_mlp_ae_forward.1} parent=1 // pred_fallthru
      _
    // Predicated region
    $region10: #{_mlp_ae_forward.1} parent=1 // pred_check
      _
    $region11: #{_mlp_ae_forward.1} parent=1 // pred_check_branch
      %43 = sbr.rel (0) target = $region13
    $region12: #{_mlp_ae_forward.1} parent=1 // pred_region
      _
    $region13: #{_mlp_ae_forward.1} parent=1 // pred_fallthru
      _
    // Predicated region
    $region14: #{_mlp_ae_forward.1} parent=1 // pred_check
      _
    $region15: #{_mlp_ae_forward.1} parent=1 // pred_check_branch
      %45 = sbr.rel (0) target = $region17
    $region16: #{_mlp_ae_forward.1} parent=1 // pred_region
      %47 = vsyncadd [#allocation5], 0
      %s48 = sshll.u32 %s3, 4
      %s49 = int_to_ptr.hbm [resolvable:$true] %s48
      %s50 = sshll.u32 [#allocation4], 4
      %s51 = int_to_ptr.vmem [resolvable:$true] %s50
      %56 = dma.hbm_to_vmem [thread:$0]  %s49, 1024, %s51, [#allocation5], 64, 64, 4
    $region17: #{_mlp_ae_forward.1} parent=1 // pred_fallthru
      _
    // Predicated region
    $region18: #{_mlp_ae_forward.1} parent=1 // pred_check
      _
    $region19: #{_mlp_ae_forward.1} parent=1 // pred_check_branch
      %58 = sbr.rel (0) target = $region21
    $region20: #{_mlp_ae_forward.1} parent=1 // pred_region
      _
    $region21: #{_mlp_ae_forward.1} parent=1 // pred_fallthru
      _
    // Predicated region
    $region22: #{_mlp_ae_forward.1} parent=1 // pred_check
      _
    $region23: #{_mlp_ae_forward.1} parent=1 // pred_check_branch
      %60 = sbr.rel (0) target = $region25
    $region24: #{_mlp_ae_forward.1} parent=1 // pred_region
      %62 = vsyncadd [#allocation5], 0
      %s63 = sshll.u32 %s5, 4
      %s64 = int_to_ptr.hbm [resolvable:$true] %s63
      %s65 = sshll.u32 [#allocation6], 4
      %s66 = int_to_ptr.vmem [resolvable:$true] %s65
      %71 = dma.hbm_to_vmem [thread:$0]  %s64, 1024, %s66, [#allocation5], 64, 64, 4
    $region25: #{_mlp_ae_forward.1} parent=1 // pred_fallthru
      _
    // Predicated region
    $region26: #{_mlp_ae_forward.1} parent=1 // pred_check
      _
    $region27: #{_mlp_ae_forward.1} parent=1 // pred_check_branch
      %73 = sbr.rel (0) target = $region29
    $region28: #{_mlp_ae_forward.1} parent=1 // pred_region
      _
    $region29: #{_mlp_ae_forward.1} parent=1 // pred_fallthru
      _
    // Predicated region
    $region30: #{_mlp_ae_forward.1} parent=1 // pred_check
      _
    $region31: #{_mlp_ae_forward.1} parent=1 // pred_check_branch
      %75 = sbr.rel (0) target = $region33
    $region32: #{_mlp_ae_forward.1} parent=1 // pred_region
      %77 = vsyncadd [#allocation8], 0
      %s78 = sshll.u32 %s7, 4
      %s79 = int_to_ptr.hbm [resolvable:$true] %s78
      %s80 = sshll.u32 [#allocation7], 4
      %s81 = int_to_ptr.vmem [resolvable:$true] %s80
      %86 = dma.hbm_to_vmem [thread:$0]  %s79, 1024, %s81, [#allocation8], 64, 64, 4
    $region33: #{_mlp_ae_forward.1} parent=1 // pred_fallthru
      _
    // Predicated region
    $region34: #{_mlp_ae_forward.1} parent=1 // pred_check
      _
    $region35: #{_mlp_ae_forward.1} parent=1 // pred_check_branch
      %88 = sbr.rel (0) target = $region37
    $region36: #{_mlp_ae_forward.1} parent=1 // pred_region
      _
    $region37: #{_mlp_ae_forward.1} parent=1 // pred_fallthru
      _
    // Predicated region
    $region38: #{_mlp_ae_forward.1} parent=1 // pred_check
      _
    $region39: #{_mlp_ae_forward.1} parent=1 // pred_check_branch
      %90 = sbr.rel (0) target = $region41
    $region40: #{_mlp_ae_forward.1} parent=1 // pred_region
      %92 = vsyncadd [#allocation8], 0
      %s93 = sshll.u32 %s9, 4
      %s94 = int_to_ptr.hbm [resolvable:$true] %s93
      %s95 = sshll.u32 [#allocation9], 4
      %s96 = int_to_ptr.vmem [resolvable:$true] %s95
      %101 = dma.hbm_to_vmem [thread:$0]  %s94, 1024, %s96, [#allocation8], 64, 64, 4
    $region41: #{_mlp_ae_forward.1} parent=1 // pred_fallthru
      _
    // Predicated region
    $region42: #{_mlp_ae_forward.1} parent=1 // pred_check
      _
    $region43: #{_mlp_ae_forward.1} parent=1 // pred_check_branch
      %103 = sbr.rel (0) target = $region45
    $region44: #{_mlp_ae_forward.1} parent=1 // pred_region
      _
    $region45: #{_mlp_ae_forward.1} parent=1 // pred_fallthru
      _
    // Predicated region
    $region46: #{_mlp_ae_forward.1} parent=1 // pred_check
      _
    $region47: #{_mlp_ae_forward.1} parent=1 // pred_check_branch
      %105 = sbr.rel (0) target = $region49
    $region48: #{_mlp_ae_forward.1} parent=1 // pred_region
      %107 = vsyncadd [#allocation11], 0
      %s108 = sshll.u32 %s11, 4
      %s109 = int_to_ptr.hbm [resolvable:$true] %s108
      %s110 = sshll.u32 [#allocation10], 4
      %s111 = int_to_ptr.vmem [resolvable:$true] %s110
      %116 = dma.hbm_to_vmem [thread:$0]  %s109, 1024, %s111, [#allocation11], 64, 64, 4
    $region49: #{_mlp_ae_forward.1} parent=1 // pred_fallthru
      _
    // Predicated region
    $region50: #{_mlp_ae_forward.1} parent=1 // pred_check
      _
    $region51: #{_mlp_ae_forward.1} parent=1 // pred_check_branch
      %118 = sbr.rel (0) target = $region53
    $region52: #{_mlp_ae_forward.1} parent=1 // pred_region
      _
    $region53: #{_mlp_ae_forward.1} parent=1 // pred_fallthru
      _
    // Predicated region
    $region54: #{_mlp_ae_forward.1} parent=1 // pred_check
      _
    $region55: #{_mlp_ae_forward.1} parent=1 // pred_check_branch
      %120 = sbr.rel (0) target = $region57
    $region56: #{_mlp_ae_forward.1} parent=1 // pred_region
      %122 = vsyncadd [#allocation11], 0
      %s123 = sshll.u32 %s13, 4
      %s124 = int_to_ptr.hbm [resolvable:$true] %s123
      %s125 = sshll.u32 [#allocation12], 4
      %s126 = int_to_ptr.vmem [resolvable:$true] %s125
      %131 = dma.hbm_to_vmem [thread:$0]  %s124, 1024, %s126, [#allocation11], 64, 64, 4
    $region57: #{_mlp_ae_forward.1} parent=1 // pred_fallthru
      _
    // Predicated region
    $region58: #{_mlp_ae_forward.1} parent=1 // pred_check
      _
    $region59: #{_mlp_ae_forward.1} parent=1 // pred_check_branch
      %133 = sbr.rel (0) target = $region61
    $region60: #{_mlp_ae_forward.1} parent=1 // pred_region
      _
    $region61: #{_mlp_ae_forward.1} parent=1 // pred_fallthru
      _
    // Predicated region
    $region62: #{_mlp_ae_forward.1} parent=1 // pred_check
      _
    $region63: #{_mlp_ae_forward.1} parent=1 // pred_check_branch
      %135 = sbr.rel (0) target = $region65
    $region64: #{_mlp_ae_forward.1} parent=1 // pred_region
      %137 = vsyncadd [#allocation14], 0
      %s138 = sshll.u32 %s15, 4
      %s139 = int_to_ptr.hbm [resolvable:$true] %s138
      %s140 = sshll.u32 [#allocation13], 4
      %s141 = int_to_ptr.vmem [resolvable:$true] %s140
      %146 = dma.hbm_to_vmem [thread:$0]  %s139, 1024, %s141, [#allocation14], 64, 64, 4
    $region65: #{_mlp_ae_forward.1} parent=1 // pred_fallthru
      _
    // Predicated region
    $region66: #{_mlp_ae_forward.1} parent=1 // pred_check
      _
    $region67: #{_mlp_ae_forward.1} parent=1 // pred_check_branch
      %148 = sbr.rel (0) target = $region69
    $region68: #{_mlp_ae_forward.1} parent=1 // pred_region
      _
    $region69: #{_mlp_ae_forward.1} parent=1 // pred_fallthru
      _
    // Predicated region
    $region70: #{_mlp_ae_forward.1} parent=1 // pred_check
      _
    $region71: #{_mlp_ae_forward.1} parent=1 // pred_check_branch
      %150 = sbr.rel (0) target = $region73
    $region72: #{_mlp_ae_forward.1} parent=1 // pred_region
      %152 = dma.done [#allocation3], 1024
    $region73: #{_mlp_ae_forward.1} parent=1 // pred_fallthru
      _
    // Predicated region
    $region74: #{_mlp_ae_forward.1} parent=1 // pred_check
      _
    $region75: #{_mlp_ae_forward.1} parent=1 // pred_check_branch
      %154 = sbr.rel (0) target = $region77
    $region76: #{_mlp_ae_forward.1} parent=1 // pred_region
      %156 = dma.done [#allocation5], 1024
    $region77: #{_mlp_ae_forward.1} parent=1 // pred_fallthru
      _
    // Predicated region
    $region78: #{_mlp_ae_forward.1} parent=1 // pred_check
      _
    $region79: #{_mlp_ae_forward.1} parent=1 // pred_check_branch
      %158 = sbr.rel (0) target = $region81
    $region80: #{_mlp_ae_forward.1} parent=1 // pred_region
      %160 = dma.done [#allocation5], 1024
    $region81: #{_mlp_ae_forward.1} parent=1 // pred_fallthru
      _
    // Predicated region
    $region82: #{_mlp_ae_forward.1} parent=1 // pred_check
      _
    $region83: #{_mlp_ae_forward.1} parent=1 // pred_check_branch
      %162 = sbr.rel (0) target = $region85
    $region84: #{_mlp_ae_forward.1} parent=1 // pred_region
      %164 = dma.done [#allocation8], 1024
    $region85: #{_mlp_ae_forward.1} parent=1 // pred_fallthru
      _
    // Predicated region
    $region86: #{_mlp_ae_forward.1} parent=1 // pred_check
      _
    $region87: #{_mlp_ae_forward.1} parent=1 // pred_check_branch
      %166 = sbr.rel (0) target = $region89
    $region88: #{_mlp_ae_forward.1} parent=1 // pred_region
      %168 = dma.done [#allocation8], 1024
    $region89: #{_mlp_ae_forward.1} parent=1 // pred_fallthru
      _
    // Predicated region
    $region90: #{_mlp_ae_forward.1} parent=1 // pred_check
      _
    $region91: #{_mlp_ae_forward.1} parent=1 // pred_check_branch
      %170 = sbr.rel (0) target = $region93
    $region92: #{_mlp_ae_forward.1} parent=1 // pred_region
      %172 = dma.done [#allocation11], 1024
    $region93: #{_mlp_ae_forward.1} parent=1 // pred_fallthru
      _
    // Predicated region
    $region94: #{_mlp_ae_forward.1} parent=1 // pred_check
      _
    $region95: #{_mlp_ae_forward.1} parent=1 // pred_check_branch
      %174 = sbr.rel (0) target = $region97
    $region96: #{_mlp_ae_forward.1} parent=1 // pred_region
      %176 = dma.done [#allocation11], 1024
    $region97: #{_mlp_ae_forward.1} parent=1 // pred_fallthru
      _
    // Predicated region
    $region98: #{_mlp_ae_forward.1} parent=1 // pred_check
      _
    $region99: #{_mlp_ae_forward.1} parent=1 // pred_check_branch
      %178 = sbr.rel (0) target = $region101
    $region100: #{_mlp_ae_forward.1} parent=1 // pred_region
      %180 = dma.done [#allocation14], 1024
    $region101: #{_mlp_ae_forward.1} parent=1 // pred_fallthru
      _
    %v181 = vld [vmem:[%s0] sm:$0xf]
    %v182 = vld [vmem:[%s0 + $0x4] sm:$0xf]
    %v183 = vld [vmem:[#allocation2] sm:$0xf]
    %v184 = vld [vmem:[#allocation2 + $0x4] sm:$0xf]
    %v185 = vld [vmem:[#allocation2 + $0x8] sm:$0xf]
    %v186 = vld [vmem:[#allocation2 + $0xc] sm:$0xf]
    %v187 = vld [vmem:[#allocation2 + $0x10] sm:$0xf]
    %v188 = vld [vmem:[#allocation2 + $0x14] sm:$0xf]
    %v189 = vld [vmem:[#allocation2 + $0x18] sm:$0xf]
    %v190 = vld [vmem:[#allocation2 + $0x1c] sm:$0xf]
    %v191 = vld [vmem:[#allocation2 + $0x20] sm:$0xf]
    %v192 = vld [vmem:[#allocation2 + $0x24] sm:$0xf]
    %v193 = vld [vmem:[#allocation2 + $0x28] sm:$0xf]
    %v194 = vld [vmem:[#allocation2 + $0x2c] sm:$0xf]
    %v195 = vld [vmem:[#allocation2 + $0x30] sm:$0xf]
    %v196 = vld [vmem:[#allocation2 + $0x34] sm:$0xf]
    %v197 = vld [vmem:[#allocation2 + $0x38] sm:$0xf]
    %v198 = vld [vmem:[#allocation2 + $0x3c] sm:$0xf]
    %v199 = vld [vmem:[%s2] sm:$0x1]
    %v201 = vperm.slane %v199, 0
    %v205 = vunpack.c.l.b16 %v181
    %v206 = vunpack.c.l.b16 %v182
    %v207 = vpack.c.b16 %v206, %v205
    %v225 = vunpack.c.l.b16 %v183
    %v226 = vunpack.c.l.b16 %v184
    %v227 = vunpack.c.l.b16 %v185
    %v228 = vunpack.c.l.b16 %v186
    %v229 = vunpack.c.l.b16 %v187
    %v230 = vunpack.c.l.b16 %v188
    %v231 = vunpack.c.l.b16 %v189
    %v232 = vunpack.c.l.b16 %v190
    %v233 = vunpack.c.l.b16 %v191
    %v234 = vunpack.c.l.b16 %v192
    %v235 = vunpack.c.l.b16 %v193
    %v236 = vunpack.c.l.b16 %v194
    %v237 = vunpack.c.l.b16 %v195
    %v238 = vunpack.c.l.b16 %v196
    %v239 = vunpack.c.l.b16 %v197
    %v240 = vunpack.c.l.b16 %v198
    %v241 = vpack.c.b16 %v226, %v225
    %v242 = vpack.c.b16 %v228, %v227
    %v243 = vpack.c.b16 %v230, %v229
    %v244 = vpack.c.b16 %v232, %v231
    %v245 = vpack.c.b16 %v234, %v233
    %v246 = vpack.c.b16 %v236, %v235
    %v247 = vpack.c.b16 %v238, %v237
    %v248 = vpack.c.b16 %v240, %v239
    %257 = vmatpush.bf16.msra.mxu0 %v248
    %258 = vmatpush.bf16.msra.mxu0 %v247
    %259 = vmatpush.bf16.msra.mxu0 %v246
    %260 = vmatpush.bf16.msra.mxu0 %v245
    %261 = vmatpush.bf16.msra.mxu0 %v244
    %262 = vmatpush.bf16.msra.mxu0 %v243
    %263 = vmatpush.bf16.msra.mxu0 %v242
    %264 = vmatpush.bf16.msra.mxu0 %v241
    %265 = vmatmul.bf16.gmra.mxu0 %v207
    %v266 = vpop.f32.mrf.mxu0
    %v267 = vadd.f32 %v201, %v266
    %v268 = vpop.f32.mrf.mxu0
    %v269 = vadd.f32 %v201, %v268
    %270 = vdwg.mxu0
    %v271 = vmax.f32 %v267, 0.0
    %v272 = vmax.f32 %v269, 0.0
    %v273 = vpack.c.bf16 %v272, %v271
    %v274 = vld [vmem:[#allocation4] sm:$0xf]
    %v275 = vld [vmem:[#allocation4 + $0x4] sm:$0xf]
    %v276 = vld [vmem:[#allocation4 + $0x8] sm:$0xf]
    %v277 = vld [vmem:[#allocation4 + $0xc] sm:$0xf]
    %v278 = vld [vmem:[#allocation4 + $0x10] sm:$0xf]
    %v279 = vld [vmem:[#allocation4 + $0x14] sm:$0xf]
    %v280 = vld [vmem:[#allocation4 + $0x18] sm:$0xf]
    %v281 = vld [vmem:[#allocation4 + $0x1c] sm:$0xf]
    %v282 = vld [vmem:[#allocation4 + $0x20] sm:$0xf]
    %v283 = vld [vmem:[#allocation4 + $0x24] sm:$0xf]
    %v284 = vld [vmem:[#allocation4 + $0x28] sm:$0xf]
    %v285 = vld [vmem:[#allocation4 + $0x2c] sm:$0xf]
    %v286 = vld [vmem:[#allocation4 + $0x30] sm:$0xf]
    %v287 = vld [vmem:[#allocation4 + $0x34] sm:$0xf]
    %v288 = vld [vmem:[#allocation4 + $0x38] sm:$0xf]
    %v289 = vld [vmem:[#allocation4 + $0x3c] sm:$0xf]
    %v290 = vld [vmem:[%s4] sm:$0x1]
    %v292 = vperm.slane %v290, 0
    %v310 = vunpack.c.l.b16 %v274
    %v311 = vunpack.c.l.b16 %v275
    %v312 = vunpack.c.l.b16 %v276
    %v313 = vunpack.c.l.b16 %v277
    %v314 = vunpack.c.l.b16 %v278
    %v315 = vunpack.c.l.b16 %v279
    %v316 = vunpack.c.l.b16 %v280
    %v317 = vunpack.c.l.b16 %v281
    %v318 = vunpack.c.l.b16 %v282
    %v319 = vunpack.c.l.b16 %v283
    %v320 = vunpack.c.l.b16 %v284
    %v321 = vunpack.c.l.b16 %v285
    %v322 = vunpack.c.l.b16 %v286
    %v323 = vunpack.c.l.b16 %v287
    %v324 = vunpack.c.l.b16 %v288
    %v325 = vunpack.c.l.b16 %v289
    %v326 = vpack.c.b16 %v311, %v310
    %v327 = vpack.c.b16 %v313, %v312
    %v328 = vpack.c.b16 %v315, %v314
    %v329 = vpack.c.b16 %v317, %v316
    %v330 = vpack.c.b16 %v319, %v318
    %v331 = vpack.c.b16 %v321, %v320
    %v332 = vpack.c.b16 %v323, %v322
    %v333 = vpack.c.b16 %v325, %v324
    %342 = vmatpush.bf16.msra.mxu0 %v333
    %343 = vmatpush.bf16.msra.mxu0 %v332
    %344 = vmatpush.bf16.msra.mxu0 %v331
    %345 = vmatpush.bf16.msra.mxu0 %v330
    %346 = vmatpush.bf16.msra.mxu0 %v329
    %347 = vmatpush.bf16.msra.mxu0 %v328
    %348 = vmatpush.bf16.msra.mxu0 %v327
    %349 = vmatpush.bf16.msra.mxu0 %v326
    %350 = vmatmul.bf16.gmra.mxu0 %v273
    %v351 = vpop.f32.mrf.mxu0
    %v352 = vadd.f32 %v292, %v351
    %v353 = vpop.f32.mrf.mxu0
    %v354 = vadd.f32 %v292, %v353
    %355 = vdwg.mxu0
    %v356 = vmax.f32 %v352, 0.0
    %v357 = vmax.f32 %v354, 0.0
    %v358 = vpack.c.bf16 %v357, %v356
    %v359 = vld [vmem:[#allocation6] sm:$0xf]
    %v360 = vld [vmem:[#allocation6 + $0x4] sm:$0xf]
    %v361 = vld [vmem:[#allocation6 + $0x8] sm:$0xf]
    %v362 = vld [vmem:[#allocation6 + $0xc] sm:$0xf]
    %v363 = vld [vmem:[#allocation6 + $0x10] sm:$0xf]
    %v364 = vld [vmem:[#allocation6 + $0x14] sm:$0xf]
    %v365 = vld [vmem:[#allocation6 + $0x18] sm:$0xf]
    %v366 = vld [vmem:[#allocation6 + $0x1c] sm:$0xf]
    %v367 = vld [vmem:[#allocation6 + $0x20] sm:$0xf]
    %v368 = vld [vmem:[#allocation6 + $0x24] sm:$0xf]
    %v369 = vld [vmem:[#allocation6 + $0x28] sm:$0xf]
    %v370 = vld [vmem:[#allocation6 + $0x2c] sm:$0xf]
    %v371 = vld [vmem:[#allocation6 + $0x30] sm:$0xf]
    %v372 = vld [vmem:[#allocation6 + $0x34] sm:$0xf]
    %v373 = vld [vmem:[#allocation6 + $0x38] sm:$0xf]
    %v374 = vld [vmem:[#allocation6 + $0x3c] sm:$0xf]
    %v375 = vld [vmem:[%s6] sm:$0x1]
    %v377 = vperm.slane %v375, 0
    %v395 = vunpack.c.l.b16 %v359
    %v396 = vunpack.c.l.b16 %v360
    %v397 = vunpack.c.l.b16 %v361
    %v398 = vunpack.c.l.b16 %v362
    %v399 = vunpack.c.l.b16 %v363
    %v400 = vunpack.c.l.b16 %v364
    %v401 = vunpack.c.l.b16 %v365
    %v402 = vunpack.c.l.b16 %v366
    %v403 = vunpack.c.l.b16 %v367
    %v404 = vunpack.c.l.b16 %v368
    %v405 = vunpack.c.l.b16 %v369
    %v406 = vunpack.c.l.b16 %v370
    %v407 = vunpack.c.l.b16 %v371
    %v408 = vunpack.c.l.b16 %v372
    %v409 = vunpack.c.l.b16 %v373
    %v410 = vunpack.c.l.b16 %v374
    %v411 = vpack.c.b16 %v396, %v395
    %v412 = vpack.c.b16 %v398, %v397
    %v413 = vpack.c.b16 %v400, %v399
    %v414 = vpack.c.b16 %v402, %v401
    %v415 = vpack.c.b16 %v404, %v403
    %v416 = vpack.c.b16 %v406, %v405
    %v417 = vpack.c.b16 %v408, %v407
    %v418 = vpack.c.b16 %v410, %v409
    %427 = vmatpush.bf16.msra.mxu0 %v418
    %428 = vmatpush.bf16.msra.mxu0 %v417
    %429 = vmatpush.bf16.msra.mxu0 %v416
    %430 = vmatpush.bf16.msra.mxu0 %v415
    %431 = vmatpush.bf16.msra.mxu0 %v414
    %432 = vmatpush.bf16.msra.mxu0 %v413
    %433 = vmatpush.bf16.msra.mxu0 %v412
    %434 = vmatpush.bf16.msra.mxu0 %v411
    %435 = vmatmul.bf16.gmra.mxu0 %v358
    %v436 = vpop.f32.mrf.mxu0
    %v437 = vadd.f32 %v377, %v436
    %v438 = vpop.f32.mrf.mxu0
    %v439 = vadd.f32 %v377, %v438
    %440 = vdwg.mxu0
    %v441 = vmax.f32 %v437, 0.0
    %v442 = vmax.f32 %v439, 0.0
    %v443 = vpack.c.bf16 %v442, %v441
    %v444 = vld [vmem:[#allocation7] sm:$0xf]
    %v445 = vld [vmem:[#allocation7 + $0x4] sm:$0xf]
    %v446 = vld [vmem:[#allocation7 + $0x8] sm:$0xf]
    %v447 = vld [vmem:[#allocation7 + $0xc] sm:$0xf]
    %v448 = vld [vmem:[#allocation7 + $0x10] sm:$0xf]
    %v449 = vld [vmem:[#allocation7 + $0x14] sm:$0xf]
    %v450 = vld [vmem:[#allocation7 + $0x18] sm:$0xf]
    %v451 = vld [vmem:[#allocation7 + $0x1c] sm:$0xf]
    %v452 = vld [vmem:[#allocation7 + $0x20] sm:$0xf]
    %v453 = vld [vmem:[#allocation7 + $0x24] sm:$0xf]
    %v454 = vld [vmem:[#allocation7 + $0x28] sm:$0xf]
    %v455 = vld [vmem:[#allocation7 + $0x2c] sm:$0xf]
    %v456 = vld [vmem:[#allocation7 + $0x30] sm:$0xf]
    %v457 = vld [vmem:[#allocation7 + $0x34] sm:$0xf]
    %v458 = vld [vmem:[#allocation7 + $0x38] sm:$0xf]
    %v459 = vld [vmem:[#allocation7 + $0x3c] sm:$0xf]
    %v460 = vld [vmem:[%s8] sm:$0x1]
    %v462 = vperm.slane %v460, 0
    %v480 = vunpack.c.l.b16 %v444
    %v481 = vunpack.c.l.b16 %v445
    %v482 = vunpack.c.l.b16 %v446
    %v483 = vunpack.c.l.b16 %v447
    %v484 = vunpack.c.l.b16 %v448
    %v485 = vunpack.c.l.b16 %v449
    %v486 = vunpack.c.l.b16 %v450
    %v487 = vunpack.c.l.b16 %v451
    %v488 = vunpack.c.l.b16 %v452
    %v489 = vunpack.c.l.b16 %v453
    %v490 = vunpack.c.l.b16 %v454
    %v491 = vunpack.c.l.b16 %v455
    %v492 = vunpack.c.l.b16 %v456
    %v493 = vunpack.c.l.b16 %v457
    %v494 = vunpack.c.l.b16 %v458
    %v495 = vunpack.c.l.b16 %v459
    %v496 = vpack.c.b16 %v481, %v480
    %v497 = vpack.c.b16 %v483, %v482
    %v498 = vpack.c.b16 %v485, %v484
    %v499 = vpack.c.b16 %v487, %v486
    %v500 = vpack.c.b16 %v489, %v488
    %v501 = vpack.c.b16 %v491, %v490
    %v502 = vpack.c.b16 %v493, %v492
    %v503 = vpack.c.b16 %v495, %v494
    %512 = vmatpush.bf16.msra.mxu0 %v503
    %513 = vmatpush.bf16.msra.mxu0 %v502
    %514 = vmatpush.bf16.msra.mxu0 %v501
    %515 = vmatpush.bf16.msra.mxu0 %v500
    %516 = vmatpush.bf16.msra.mxu0 %v499
    %517 = vmatpush.bf16.msra.mxu0 %v498
    %518 = vmatpush.bf16.msra.mxu0 %v497
    %519 = vmatpush.bf16.msra.mxu0 %v496
    %520 = vmatmul.bf16.gmra.mxu0 %v443
    %v521 = vpop.f32.mrf.mxu0
    %v522 = vadd.f32 %v462, %v521
    %v523 = vpop.f32.mrf.mxu0
    %v524 = vadd.f32 %v462, %v523
    %525 = vdwg.mxu0
    %v526 = vpack.c.bf16 %v524, %v522
    %v527 = vld [vmem:[#allocation9] sm:$0xf]
    %v528 = vld [vmem:[#allocation9 + $0x4] sm:$0xf]
    %v529 = vld [vmem:[#allocation9 + $0x8] sm:$0xf]
    %v530 = vld [vmem:[#allocation9 + $0xc] sm:$0xf]
    %v531 = vld [vmem:[#allocation9 + $0x10] sm:$0xf]
    %v532 = vld [vmem:[#allocation9 + $0x14] sm:$0xf]
    %v533 = vld [vmem:[#allocation9 + $0x18] sm:$0xf]
    %v534 = vld [vmem:[#allocation9 + $0x1c] sm:$0xf]
    %v535 = vld [vmem:[#allocation9 + $0x20] sm:$0xf]
    %v536 = vld [vmem:[#allocation9 + $0x24] sm:$0xf]
    %v537 = vld [vmem:[#allocation9 + $0x28] sm:$0xf]
    %v538 = vld [vmem:[#allocation9 + $0x2c] sm:$0xf]
    %v539 = vld [vmem:[#allocation9 + $0x30] sm:$0xf]
    %v540 = vld [vmem:[#allocation9 + $0x34] sm:$0xf]
    %v541 = vld [vmem:[#allocation9 + $0x38] sm:$0xf]
    %v542 = vld [vmem:[#allocation9 + $0x3c] sm:$0xf]
    %v543 = vld [vmem:[%s10] sm:$0x1]
    %v545 = vperm.slane %v543, 0
    %v563 = vunpack.c.l.b16 %v527
    %v564 = vunpack.c.l.b16 %v528
    %v565 = vunpack.c.l.b16 %v529
    %v566 = vunpack.c.l.b16 %v530
    %v567 = vunpack.c.l.b16 %v531
    %v568 = vunpack.c.l.b16 %v532
    %v569 = vunpack.c.l.b16 %v533
    %v570 = vunpack.c.l.b16 %v534
    %v571 = vunpack.c.l.b16 %v535
    %v572 = vunpack.c.l.b16 %v536
    %v573 = vunpack.c.l.b16 %v537
    %v574 = vunpack.c.l.b16 %v538
    %v575 = vunpack.c.l.b16 %v539
    %v576 = vunpack.c.l.b16 %v540
    %v577 = vunpack.c.l.b16 %v541
    %v578 = vunpack.c.l.b16 %v542
    %v579 = vpack.c.b16 %v564, %v563
    %v580 = vpack.c.b16 %v566, %v565
    %v581 = vpack.c.b16 %v568, %v567
    %v582 = vpack.c.b16 %v570, %v569
    %v583 = vpack.c.b16 %v572, %v571
    %v584 = vpack.c.b16 %v574, %v573
    %v585 = vpack.c.b16 %v576, %v575
    %v586 = vpack.c.b16 %v578, %v577
    %595 = vmatpush.bf16.msra.mxu0 %v586
    %596 = vmatpush.bf16.msra.mxu0 %v585
    %597 = vmatpush.bf16.msra.mxu0 %v584
    %598 = vmatpush.bf16.msra.mxu0 %v583
    %599 = vmatpush.bf16.msra.mxu0 %v582
    %600 = vmatpush.bf16.msra.mxu0 %v581
    %601 = vmatpush.bf16.msra.mxu0 %v580
    %602 = vmatpush.bf16.msra.mxu0 %v579
    %603 = vmatmul.bf16.gmra.mxu0 %v526
    %v604 = vpop.f32.mrf.mxu0
    %v605 = vadd.f32 %v545, %v604
    %v606 = vpop.f32.mrf.mxu0
    %v607 = vadd.f32 %v545, %v606
    %608 = vdwg.mxu0
    %v609 = vmax.f32 %v605, 0.0
    %v610 = vmax.f32 %v607, 0.0
    %v611 = vpack.c.bf16 %v610, %v609
    %v612 = vld [vmem:[#allocation10] sm:$0xf]
    %v613 = vld [vmem:[#allocation10 + $0x4] sm:$0xf]
    %v614 = vld [vmem:[#allocation10 + $0x8] sm:$0xf]
    %v615 = vld [vmem:[#allocation10 + $0xc] sm:$0xf]
    %v616 = vld [vmem:[#allocation10 + $0x10] sm:$0xf]
    %v617 = vld [vmem:[#allocation10 + $0x14] sm:$0xf]
    %v618 = vld [vmem:[#allocation10 + $0x18] sm:$0xf]
    %v619 = vld [vmem:[#allocation10 + $0x1c] sm:$0xf]
    %v620 = vld [vmem:[#allocation10 + $0x20] sm:$0xf]
    %v621 = vld [vmem:[#allocation10 + $0x24] sm:$0xf]
    %v622 = vld [vmem:[#allocation10 + $0x28] sm:$0xf]
    %v623 = vld [vmem:[#allocation10 + $0x2c] sm:$0xf]
    %v624 = vld [vmem:[#allocation10 + $0x30] sm:$0xf]
    %v625 = vld [vmem:[#allocation10 + $0x34] sm:$0xf]
    %v626 = vld [vmem:[#allocation10 + $0x38] sm:$0xf]
    %v627 = vld [vmem:[#allocation10 + $0x3c] sm:$0xf]
    %v628 = vld [vmem:[%s12] sm:$0x1]
    %v630 = vperm.slane %v628, 0
    %v648 = vunpack.c.l.b16 %v612
    %v649 = vunpack.c.l.b16 %v613
    %v650 = vunpack.c.l.b16 %v614
    %v651 = vunpack.c.l.b16 %v615
    %v652 = vunpack.c.l.b16 %v616
    %v653 = vunpack.c.l.b16 %v617
    %v654 = vunpack.c.l.b16 %v618
    %v655 = vunpack.c.l.b16 %v619
    %v656 = vunpack.c.l.b16 %v620
    %v657 = vunpack.c.l.b16 %v621
    %v658 = vunpack.c.l.b16 %v622
    %v659 = vunpack.c.l.b16 %v623
    %v660 = vunpack.c.l.b16 %v624
    %v661 = vunpack.c.l.b16 %v625
    %v662 = vunpack.c.l.b16 %v626
    %v663 = vunpack.c.l.b16 %v627
    %v664 = vpack.c.b16 %v649, %v648
    %v665 = vpack.c.b16 %v651, %v650
    %v666 = vpack.c.b16 %v653, %v652
    %v667 = vpack.c.b16 %v655, %v654
    %v668 = vpack.c.b16 %v657, %v656
    %v669 = vpack.c.b16 %v659, %v658
    %v670 = vpack.c.b16 %v661, %v660
    %v671 = vpack.c.b16 %v663, %v662
    %680 = vmatpush.bf16.msra.mxu0 %v671
    %681 = vmatpush.bf16.msra.mxu0 %v670
    %682 = vmatpush.bf16.msra.mxu0 %v669
    %683 = vmatpush.bf16.msra.mxu0 %v668
    %684 = vmatpush.bf16.msra.mxu0 %v667
    %685 = vmatpush.bf16.msra.mxu0 %v666
    %686 = vmatpush.bf16.msra.mxu0 %v665
    %687 = vmatpush.bf16.msra.mxu0 %v664
    %688 = vmatmul.bf16.gmra.mxu0 %v611
    %v689 = vpop.f32.mrf.mxu0
    %v690 = vadd.f32 %v630, %v689
    %v691 = vpop.f32.mrf.mxu0
    %v692 = vadd.f32 %v630, %v691
    %693 = vdwg.mxu0
    %v694 = vmax.f32 %v690, 0.0
    %v695 = vmax.f32 %v692, 0.0
    %v696 = vpack.c.bf16 %v695, %v694
    %v697 = vld [vmem:[#allocation12] sm:$0xf]
    %v698 = vld [vmem:[#allocation12 + $0x4] sm:$0xf]
    %v699 = vld [vmem:[#allocation12 + $0x8] sm:$0xf]
    %v700 = vld [vmem:[#allocation12 + $0xc] sm:$0xf]
    %v701 = vld [vmem:[#allocation12 + $0x10] sm:$0xf]
    %v702 = vld [vmem:[#allocation12 + $0x14] sm:$0xf]
    %v703 = vld [vmem:[#allocation12 + $0x18] sm:$0xf]
    %v704 = vld [vmem:[#allocation12 + $0x1c] sm:$0xf]
    %v705 = vld [vmem:[#allocation12 + $0x20] sm:$0xf]
    %v706 = vld [vmem:[#allocation12 + $0x24] sm:$0xf]
    %v707 = vld [vmem:[#allocation12 + $0x28] sm:$0xf]
    %v708 = vld [vmem:[#allocation12 + $0x2c] sm:$0xf]
    %v709 = vld [vmem:[#allocation12 + $0x30] sm:$0xf]
    %v710 = vld [vmem:[#allocation12 + $0x34] sm:$0xf]
    %v711 = vld [vmem:[#allocation12 + $0x38] sm:$0xf]
    %v712 = vld [vmem:[#allocation12 + $0x3c] sm:$0xf]
    %v713 = vld [vmem:[%s14] sm:$0x1]
    %v715 = vperm.slane %v713, 0
    %v733 = vunpack.c.l.b16 %v697
    %v734 = vunpack.c.l.b16 %v698
    %v735 = vunpack.c.l.b16 %v699
    %v736 = vunpack.c.l.b16 %v700
    %v737 = vunpack.c.l.b16 %v701
    %v738 = vunpack.c.l.b16 %v702
    %v739 = vunpack.c.l.b16 %v703
    %v740 = vunpack.c.l.b16 %v704
    %v741 = vunpack.c.l.b16 %v705
    %v742 = vunpack.c.l.b16 %v706
    %v743 = vunpack.c.l.b16 %v707
    %v744 = vunpack.c.l.b16 %v708
    %v745 = vunpack.c.l.b16 %v709
    %v746 = vunpack.c.l.b16 %v710
    %v747 = vunpack.c.l.b16 %v711
    %v748 = vunpack.c.l.b16 %v712
    %v749 = vpack.c.b16 %v734, %v733
    %v750 = vpack.c.b16 %v736, %v735
    %v751 = vpack.c.b16 %v738, %v737
    %v752 = vpack.c.b16 %v740, %v739
    %v753 = vpack.c.b16 %v742, %v741
    %v754 = vpack.c.b16 %v744, %v743
    %v755 = vpack.c.b16 %v746, %v745
    %v756 = vpack.c.b16 %v748, %v747
    %765 = vmatpush.bf16.msra.mxu0 %v756
    %766 = vmatpush.bf16.msra.mxu0 %v755
    %767 = vmatpush.bf16.msra.mxu0 %v754
    %768 = vmatpush.bf16.msra.mxu0 %v753
    %769 = vmatpush.bf16.msra.mxu0 %v752
    %770 = vmatpush.bf16.msra.mxu0 %v751
    %771 = vmatpush.bf16.msra.mxu0 %v750
    %772 = vmatpush.bf16.msra.mxu0 %v749
    %773 = vmatmul.bf16.gmra.mxu0 %v696
    %v774 = vpop.f32.mrf.mxu0
    %v775 = vadd.f32 %v715, %v774
    %v776 = vpop.f32.mrf.mxu0
    %v777 = vadd.f32 %v715, %v776
    %778 = vdwg.mxu0
    %v779 = vmax.f32 %v775, 0.0
    %v780 = vmax.f32 %v777, 0.0
    %v781 = vpack.c.bf16 %v780, %v779
    %v782 = vld [vmem:[#allocation13] sm:$0xf]
    %v783 = vld [vmem:[#allocation13 + $0x4] sm:$0xf]
    %v784 = vld [vmem:[#allocation13 + $0x8] sm:$0xf]
    %v785 = vld [vmem:[#allocation13 + $0xc] sm:$0xf]
    %v786 = vld [vmem:[#allocation13 + $0x10] sm:$0xf]
    %v787 = vld [vmem:[#allocation13 + $0x14] sm:$0xf]
    %v788 = vld [vmem:[#allocation13 + $0x18] sm:$0xf]
    %v789 = vld [vmem:[#allocation13 + $0x1c] sm:$0xf]
    %v790 = vld [vmem:[#allocation13 + $0x20] sm:$0xf]
    %v791 = vld [vmem:[#allocation13 + $0x24] sm:$0xf]
    %v792 = vld [vmem:[#allocation13 + $0x28] sm:$0xf]
    %v793 = vld [vmem:[#allocation13 + $0x2c] sm:$0xf]
    %v794 = vld [vmem:[#allocation13 + $0x30] sm:$0xf]
    %v795 = vld [vmem:[#allocation13 + $0x34] sm:$0xf]
    %v796 = vld [vmem:[#allocation13 + $0x38] sm:$0xf]
    %v797 = vld [vmem:[#allocation13 + $0x3c] sm:$0xf]
    %v798 = vld [vmem:[%s16] sm:$0x1]
    %v800 = vperm.slane %v798, 0
    %v818 = vunpack.c.l.b16 %v782
    %v819 = vunpack.c.l.b16 %v783
    %v820 = vunpack.c.l.b16 %v784
    %v821 = vunpack.c.l.b16 %v785
    %v822 = vunpack.c.l.b16 %v786
    %v823 = vunpack.c.l.b16 %v787
    %v824 = vunpack.c.l.b16 %v788
    %v825 = vunpack.c.l.b16 %v789
    %v826 = vunpack.c.l.b16 %v790
    %v827 = vunpack.c.l.b16 %v791
    %v828 = vunpack.c.l.b16 %v792
    %v829 = vunpack.c.l.b16 %v793
    %v830 = vunpack.c.l.b16 %v794
    %v831 = vunpack.c.l.b16 %v795
    %v832 = vunpack.c.l.b16 %v796
    %v833 = vunpack.c.l.b16 %v797
    %v834 = vpack.c.b16 %v819, %v818
    %v835 = vpack.c.b16 %v821, %v820
    %v836 = vpack.c.b16 %v823, %v822
    %v837 = vpack.c.b16 %v825, %v824
    %v838 = vpack.c.b16 %v827, %v826
    %v839 = vpack.c.b16 %v829, %v828
    %v840 = vpack.c.b16 %v831, %v830
    %v841 = vpack.c.b16 %v833, %v832
    %850 = vmatpush.bf16.msra.mxu0 %v841
    %851 = vmatpush.bf16.msra.mxu0 %v840
    %852 = vmatpush.bf16.msra.mxu0 %v839
    %853 = vmatpush.bf16.msra.mxu0 %v838
    %854 = vmatpush.bf16.msra.mxu0 %v837
    %855 = vmatpush.bf16.msra.mxu0 %v836
    %856 = vmatpush.bf16.msra.mxu0 %v835
    %857 = vmatpush.bf16.msra.mxu0 %v834
    %858 = vmatmul.bf16.gmra.mxu0 %v781
    %v859 = vpop.f32.mrf.mxu0
    %v860 = vadd.f32 %v800, %v859
    %v861 = vpop.f32.mrf.mxu0
    %v862 = vadd.f32 %v800, %v861
    %863 = vdwg.mxu0
    %v864 = vsub.f32 0.0, %v860
    %v865 = vsub.f32 0.0, %v862
    %v866 = vmul.f32 %v864, 1.442695
    %v867 = vpow.pop %v866
    %v868 = vmul.f32 %v865, 1.442695
    %v869 = vpow.pop %v868
    %v870 = vadd.f32 %v867, 1.0
    %v871 = vadd.f32 %v869, 1.0
    %v872 = vrcp.pop %v870
    %v873 = vmul.f32 %v870, %v872
    %v874 = vsub.f32 1.0, %v873
    %v875 = vmul.f32 %v872, %v874
    %v876 = vadd.f32 %v872, %v875
    %vm877 = vweird.f32 %v870
    %vm878 = vweird.f32 %v872
    %vm879 = vmor %vm877, %vm878
    %v880 = vsel %vm879, %v872, %v876
    %v881 = vand.u32 2147483647, %v870
    %vm882 = vcmp.eq.f32.partialorder %v881, 8.507059e+37
    %v883 = vand.u32 %v870, 2147483648
    %v884 = vor.u32 1.1754944e-38, %v883
    %v885 = vsel %vm882, %v884, %v880
    %v886 = vrcp.pop %v871
    %v887 = vmul.f32 %v871, %v886
    %v888 = vsub.f32 1.0, %v887
    %v889 = vmul.f32 %v886, %v888
    %v890 = vadd.f32 %v886, %v889
    %vm891 = vweird.f32 %v871
    %vm892 = vweird.f32 %v886
    %vm893 = vmor %vm891, %vm892
    %v894 = vsel %vm893, %v886, %v890
    %v895 = vand.u32 2147483647, %v871
    %vm896 = vcmp.eq.f32.partialorder %v895, 8.507059e+37
    %v897 = vand.u32 %v871, 2147483648
    %v898 = vor.u32 1.1754944e-38, %v897
    %v899 = vsel %vm896, %v898, %v894
    %v900 = vpack.c.bf16 %v885, %v885
    %v901 = vpack.c.bf16 %v899, %v899
    %902 = vst [vmem:[%s17] sm:$0xf] %v900
    %903 = vst [vmem:[%s17 + $0x4] sm:$0xf] %v901
    // Predicated region
    $region102: #{_mlp_ae_forward.1} parent=1 // pred_check
      _
    $region103: #{_mlp_ae_forward.1} parent=1 // pred_check_branch
      %905 = sbr.rel (0) target = $region105
    $region104: #{_mlp_ae_forward.1} parent=1 // pred_region
      _
    $region105: #{_mlp_ae_forward.1} parent=1 // pred_fallthru
      _
    // Predicated region
    $region106: #{_mlp_ae_forward.1} parent=1 // pred_check
      _
    $region107: #{_mlp_ae_forward.1} parent=1 // pred_check_branch
      %907 = sbr.rel (0) target = $region109
    $region108: #{_mlp_ae_forward.1} parent=1 // pred_region
      _
    $region109: #{_mlp_ae_forward.1} parent=1 // pred_fallthru
      _
    %908 = vsyncpa [#allocation3], 1
    %909 = vsyncpa [#allocation5], 1
    %910 = vsyncpa [#allocation8], 1
    %911 = vsyncpa [#allocation11], 1
    %912 = vsyncpa [#allocation14], 1

</llo_original>
